<compile_context>
chip_gen: v6e
topology: v6e:2x2x1
jax: 0.10.0
libtpu: 0.0.40
codegen_flags: <defaults>
</compile_context>

<pallas_src>
import functools
import math

import jax
import jax.numpy as jnp
from jax.experimental import pallas as pl
from jax.experimental.pallas import tpu as pltpu


def _conv_bn_act_kernel(x_ref, w_ref, b_ref, o_ref, *, ksize, wp, m):
    """One batch element.

    x_ref : (1, Cin, L)          bf16, zero-padded image, spatially flattened
                                 (L = Hpad * Wpad + tail margin rows)
    w_ref : (k*k, Cout, Cin)     f32, BN-scale-folded conv weights, tap-major
    b_ref : (Cout, 1)            f32, folded BN bias
    o_ref : (1, Cout, M)         bf16, M = Hout_full * Wpad (cropped in wrapper)
    """
    xp = x_ref[0].astype(jnp.float32)                 # (Cin, L) — cast once (v5e-safe)
    cout = w_ref.shape[1]

    acc = jnp.zeros((cout, m), jnp.float32)
    for t in range(ksize * ksize):                    # static unrolled taps
        off = (t // ksize) * wp + (t % ksize)         # flattened-padded tap offset
        # contiguous static slice of the flattened padded image; MXU matmul
        acc = acc + jnp.dot(w_ref[t], xp[:, off:off + m],
                            preferred_element_type=jnp.float32)

    y = jnp.maximum(acc + b_ref[...], 0.0)            # folded-BN bias + ReLU
    o_ref[0] = y.astype(o_ref.dtype)                  # lane-dense (Cout, M) store


def conv_bn_act_pallas(x, weight, gamma, beta, mean, var, *, stride=1, eps=1e-5):
    """x: (N, Cin, H, W) f32 NCHW; weight: (Cout, Cin, k, k) OIHW. Returns NCHW bf16."""
    N, Cin, H, W = x.shape
    Cout, _, k, _ = weight.shape
    p = k // 2

    Wp = W + 2 * p                                    # padded width
    Hout_full = H + 2 * p - k + 1                     # stride-1 output rows
    Wout_full = W + 2 * p - k + 1                     # stride-1 output cols
    extra = -(-(k - 1) // Wp)                         # tail-margin rows (keeps tap slices in-bounds)
    L = (H + 2 * p + extra) * Wp                      # flattened padded length
    M = Hout_full * Wp                                # flattened output length per channel

    # ---- fold BN (inference) into conv weight / bias, host-side, once ----
    s = gamma / jnp.sqrt(var + eps)
    w_fold = weight * s[:, None, None, None]
    b_fold = (beta - mean * s).reshape(Cout, 1).astype(jnp.float32)
    # tap-major weights: w_taps[ky*k + kx, o, i] = w_fold[o, i, ky, kx]
    w_taps = jnp.transpose(w_fold, (2, 3, 0, 1)).reshape(k * k, Cout, Cin)
    w_taps = w_taps.astype(jnp.float32)

    # ---- pad once + bf16 transport + free metadata flatten (row-major NCHW) ----
    xp = jnp.pad(x, ((0, 0), (0, 0), (p, p + extra), (p, p)))
    xp = xp.astype(jnp.bfloat16).reshape(N, Cin, L)

    kern = functools.partial(_conv_bn_act_kernel, ksize=k, wp=Wp, m=M)
    flops = 2 * N * k * k * Cout * Cin * M
    bytes_accessed = N * Cin * L * 2 + k * k * Cout * Cin * 4 + Cout * 4 + N * Cout * M * 2

    out_flat = pl.pallas_call(
        kern,
        out_shape=jax.ShapeDtypeStruct((N, Cout, M), jnp.bfloat16),
        grid_spec=pltpu.PrefetchScalarGridSpec(
            num_scalar_prefetch=0,
            grid=(N,),
            in_specs=[
                pl.BlockSpec((1, Cin, L), lambda n: (n, 0, 0)),
                pl.BlockSpec((k * k, Cout, Cin), lambda n: (0, 0, 0)),
                pl.BlockSpec((Cout, 1), lambda n: (0, 0)),
            ],
            out_specs=pl.BlockSpec((1, Cout, M), lambda n: (n, 0, 0)),
        ),
        compiler_params=pltpu.CompilerParams(
            dimension_semantics=("parallel",)),
        cost_estimate=pl.CostEstimate(flops=flops, transcendentals=0,
                                      bytes_accessed=bytes_accessed),
    )(xp, w_taps, b_fold)

    # Free metadata reshape, then crop the pad columns / apply stride (tiny XLA slice).
    out = out_flat.reshape(N, Cout, Hout_full, Wp)[:, :, ::stride, :Wout_full:stride]
    return out                                        # NCHW, bf16


def conv_bn_act_ref(x, weight, gamma, beta, mean, var, *, stride=1, eps=1e-5):
    """Pure-JAX reference: Conv2d(pad=k//2, no bias) + inference BN + ReLU."""
    p = weight.shape[-1] // 2
    y = jax.lax.conv_general_dilated(
        x, weight, (stride, stride), [(p, p), (p, p)],
        dimension_numbers=('NCHW', 'OIHW', 'NCHW'))
    s = (gamma / jnp.sqrt(var + eps))[None, :, None, None]
    b = (beta - mean * gamma / jnp.sqrt(var + eps))[None, :, None, None]
    return jnp.maximum(y * s + b, 0.0)


if __name__ == "__main__":
    # ConvBnAct(in_chs=4, out_chs=8, kernel_size=3, stride=1)
    N, Cin, H, W = 2, 4, 16, 16
    Cout, k, stride = 8, 3, 1
    eps = 1e-5

    key = jax.random.PRNGKey(0)
    ks = jax.random.split(key, 6)
    x = jax.random.normal(ks[0], (N, Cin, H, W), jnp.float32)
    w = jax.random.normal(ks[1], (Cout, Cin, k, k), jnp.float32) / math.sqrt(Cin * k * k)

    # BatchNorm (inference) parameters / running stats
    gamma = jax.random.uniform(ks[2], (Cout,), jnp.float32, 0.5, 1.5)
    beta = 0.1 * jax.random.normal(ks[3], (Cout,), jnp.float32)
    mean = 0.1 * jax.random.normal(ks[4], (Cout,), jnp.float32)
    var = jax.random.uniform(ks[5], (Cout,), jnp.float32, 0.5, 1.5)

    out = conv_bn_act_pallas(x, w, gamma, beta, mean, var, stride=stride, eps=eps)
    out = jax.block_until_ready(out)

    # transport-precision-matched reference (same bf16-rounded activations)
    x_r = x.astype(jnp.bfloat16).astype(jnp.float32)
    ref = conv_bn_act_ref(x_r, w, gamma, beta, mean, var, stride=stride, eps=eps)
    assert out.shape == (N, Cout, H // stride, W // stride), out.shape
    err = float(jnp.max(jnp.abs(out.astype(jnp.float32) - ref)))
    assert jnp.allclose(out.astype(jnp.float32), ref, rtol=2e-2, atol=2e-2), err

    # extra check: stride=2 path (wrapper-side subsampling of the full-res conv)
    out2 = jax.block_until_ready(
        conv_bn_act_pallas(x, w, gamma, beta, mean, var, stride=2, eps=eps))
    ref2 = conv_bn_act_ref(x_r, w, gamma, beta, mean, var, stride=2, eps=eps)
    assert out2.shape == (N, Cout, 8, 8), out2.shape
    assert jnp.allclose(out2.astype(jnp.float32), ref2, rtol=2e-2, atol=2e-2)

    print("KERNEL_OK")
</pallas_src>

<mosaic_0001>
module attributes {stable_mosaic.version = 11 : i64} {
  func.func @_conv_bn_act_kernel(%arg0: i32, %arg1: memref<1x4x342xbf16, #tpu.memory_space<vmem>>, %arg2: memref<9x8x4xf32, #tpu.memory_space<vmem>>, %arg3: memref<8x1xf32, #tpu.memory_space<vmem>>, %arg4: memref<1x8x288xbf16, #tpu.memory_space<vmem>>) attributes {dimension_semantics = [#tpu.dimension_semantics<parallel>], iteration_bounds = array<i64: 2>, scalar_prefetch = 0 : i64, scratch_operands = 0 : i64, tpu.core_type = #tpu.core_type<tc>, window_params = [{transform_indices = @transform_0, window_bounds = array<i64: 1, 4, 342>}, {pipeline_mode = #tpu.pipeline_mode<synchronous>, transform_indices = @transform_1, window_bounds = array<i64: 9, 8, 4>}, {pipeline_mode = #tpu.pipeline_mode<synchronous>, transform_indices = @transform_2, window_bounds = array<i64: 8, 1>}, {transform_indices = @transform_3, window_bounds = array<i64: 1, 8, 288>}]} {
    %c0 = arith.constant 0 : index
    %c0_0 = arith.constant 0 : index
    %c0_1 = arith.constant 0 : index
    %0 = vector.load %arg1[%c0, %c0_0, %c0_1] : memref<1x4x342xbf16, #tpu.memory_space<vmem>>, vector<1x4x342xbf16>
    %1 = vector.shape_cast %0 : vector<1x4x342xbf16> to vector<4x342xbf16>
    %2 = arith.extf %1 : vector<4x342xbf16> to vector<4x342xf32>
    %cst = arith.constant 0.000000e+00 : f32
    %3 = vector.broadcast %cst : f32 to vector<8x288xf32>
    %c0_2 = arith.constant 0 : index
    %c0_3 = arith.constant 0 : index
    %c0_4 = arith.constant 0 : index
    %4 = vector.load %arg2[%c0_2, %c0_3, %c0_4] : memref<9x8x4xf32, #tpu.memory_space<vmem>>, vector<1x8x4xf32>
    %5 = vector.shape_cast %4 : vector<1x8x4xf32> to vector<8x4xf32>
    %6 = vector.extract_strided_slice %2 {offsets = [0, 0], sizes = [4, 288], strides = [1, 1]} : vector<4x342xf32> to vector<4x288xf32>
    %cst_5 = arith.constant dense<0.000000e+00> : vector<8x288xf32>
    %7 = tpu.matmul %5, %6, %cst_5 {dimension_numbers = #tpu.dot_dimension_numbers<[1], [0], [0], [1], [0, 0, 1, 1], [], []>} : vector<8x4xf32>, vector<4x288xf32>, vector<8x288xf32> -> vector<8x288xf32>
    %8 = arith.addf %3, %7 : vector<8x288xf32>
    %c1 = arith.constant 1 : index
    %c0_6 = arith.constant 0 : index
    %c0_7 = arith.constant 0 : index
    %9 = vector.load %arg2[%c1, %c0_6, %c0_7] : memref<9x8x4xf32, #tpu.memory_space<vmem>>, vector<1x8x4xf32>
    %10 = vector.shape_cast %9 : vector<1x8x4xf32> to vector<8x4xf32>
    %11 = vector.extract_strided_slice %2 {offsets = [0, 1], sizes = [4, 288], strides = [1, 1]} : vector<4x342xf32> to vector<4x288xf32>
    %cst_8 = arith.constant dense<0.000000e+00> : vector<8x288xf32>
    %12 = tpu.matmul %10, %11, %cst_8 {dimension_numbers = #tpu.dot_dimension_numbers<[1], [0], [0], [1], [0, 0, 1, 1], [], []>} : vector<8x4xf32>, vector<4x288xf32>, vector<8x288xf32> -> vector<8x288xf32>
    %13 = arith.addf %8, %12 : vector<8x288xf32>
    %c2 = arith.constant 2 : index
    %c0_9 = arith.constant 0 : index
    %c0_10 = arith.constant 0 : index
    %14 = vector.load %arg2[%c2, %c0_9, %c0_10] : memref<9x8x4xf32, #tpu.memory_space<vmem>>, vector<1x8x4xf32>
    %15 = vector.shape_cast %14 : vector<1x8x4xf32> to vector<8x4xf32>
    %16 = vector.extract_strided_slice %2 {offsets = [0, 2], sizes = [4, 288], strides = [1, 1]} : vector<4x342xf32> to vector<4x288xf32>
    %cst_11 = arith.constant dense<0.000000e+00> : vector<8x288xf32>
    %17 = tpu.matmul %15, %16, %cst_11 {dimension_numbers = #tpu.dot_dimension_numbers<[1], [0], [0], [1], [0, 0, 1, 1], [], []>} : vector<8x4xf32>, vector<4x288xf32>, vector<8x288xf32> -> vector<8x288xf32>
    %18 = arith.addf %13, %17 : vector<8x288xf32>
    %c3 = arith.constant 3 : index
    %c0_12 = arith.constant 0 : index
    %c0_13 = arith.constant 0 : index
    %19 = vector.load %arg2[%c3, %c0_12, %c0_13] : memref<9x8x4xf32, #tpu.memory_space<vmem>>, vector<1x8x4xf32>
    %20 = vector.shape_cast %19 : vector<1x8x4xf32> to vector<8x4xf32>
    %21 = vector.extract_strided_slice %2 {offsets = [0, 18], sizes = [4, 288], strides = [1, 1]} : vector<4x342xf32> to vector<4x288xf32>
    %cst_14 = arith.constant dense<0.000000e+00> : vector<8x288xf32>
    %22 = tpu.matmul %20, %21, %cst_14 {dimension_numbers = #tpu.dot_dimension_numbers<[1], [0], [0], [1], [0, 0, 1, 1], [], []>} : vector<8x4xf32>, vector<4x288xf32>, vector<8x288xf32> -> vector<8x288xf32>
    %23 = arith.addf %18, %22 : vector<8x288xf32>
    %c4 = arith.constant 4 : index
    %c0_15 = arith.constant 0 : index
    %c0_16 = arith.constant 0 : index
    %24 = vector.load %arg2[%c4, %c0_15, %c0_16] : memref<9x8x4xf32, #tpu.memory_space<vmem>>, vector<1x8x4xf32>
    %25 = vector.shape_cast %24 : vector<1x8x4xf32> to vector<8x4xf32>
    %26 = vector.extract_strided_slice %2 {offsets = [0, 19], sizes = [4, 288], strides = [1, 1]} : vector<4x342xf32> to vector<4x288xf32>
    %cst_17 = arith.constant dense<0.000000e+00> : vector<8x288xf32>
    %27 = tpu.matmul %25, %26, %cst_17 {dimension_numbers = #tpu.dot_dimension_numbers<[1], [0], [0], [1], [0, 0, 1, 1], [], []>} : vector<8x4xf32>, vector<4x288xf32>, vector<8x288xf32> -> vector<8x288xf32>
    %28 = arith.addf %23, %27 : vector<8x288xf32>
    %c5 = arith.constant 5 : index
    %c0_18 = arith.constant 0 : index
    %c0_19 = arith.constant 0 : index
    %29 = vector.load %arg2[%c5, %c0_18, %c0_19] : memref<9x8x4xf32, #tpu.memory_space<vmem>>, vector<1x8x4xf32>
    %30 = vector.shape_cast %29 : vector<1x8x4xf32> to vector<8x4xf32>
    %31 = vector.extract_strided_slice %2 {offsets = [0, 20], sizes = [4, 288], strides = [1, 1]} : vector<4x342xf32> to vector<4x288xf32>
    %cst_20 = arith.constant dense<0.000000e+00> : vector<8x288xf32>
    %32 = tpu.matmul %30, %31, %cst_20 {dimension_numbers = #tpu.dot_dimension_numbers<[1], [0], [0], [1], [0, 0, 1, 1], [], []>} : vector<8x4xf32>, vector<4x288xf32>, vector<8x288xf32> -> vector<8x288xf32>
    %33 = arith.addf %28, %32 : vector<8x288xf32>
    %c6 = arith.constant 6 : index
    %c0_21 = arith.constant 0 : index
    %c0_22 = arith.constant 0 : index
    %34 = vector.load %arg2[%c6, %c0_21, %c0_22] : memref<9x8x4xf32, #tpu.memory_space<vmem>>, vector<1x8x4xf32>
    %35 = vector.shape_cast %34 : vector<1x8x4xf32> to vector<8x4xf32>
    %36 = vector.extract_strided_slice %2 {offsets = [0, 36], sizes = [4, 288], strides = [1, 1]} : vector<4x342xf32> to vector<4x288xf32>
    %cst_23 = arith.constant dense<0.000000e+00> : vector<8x288xf32>
    %37 = tpu.matmul %35, %36, %cst_23 {dimension_numbers = #tpu.dot_dimension_numbers<[1], [0], [0], [1], [0, 0, 1, 1], [], []>} : vector<8x4xf32>, vector<4x288xf32>, vector<8x288xf32> -> vector<8x288xf32>
    %38 = arith.addf %33, %37 : vector<8x288xf32>
    %c7 = arith.constant 7 : index
    %c0_24 = arith.constant 0 : index
    %c0_25 = arith.constant 0 : index
    %39 = vector.load %arg2[%c7, %c0_24, %c0_25] : memref<9x8x4xf32, #tpu.memory_space<vmem>>, vector<1x8x4xf32>
    %40 = vector.shape_cast %39 : vector<1x8x4xf32> to vector<8x4xf32>
    %41 = vector.extract_strided_slice %2 {offsets = [0, 37], sizes = [4, 288], strides = [1, 1]} : vector<4x342xf32> to vector<4x288xf32>
    %cst_26 = arith.constant dense<0.000000e+00> : vector<8x288xf32>
    %42 = tpu.matmul %40, %41, %cst_26 {dimension_numbers = #tpu.dot_dimension_numbers<[1], [0], [0], [1], [0, 0, 1, 1], [], []>} : vector<8x4xf32>, vector<4x288xf32>, vector<8x288xf32> -> vector<8x288xf32>
    %43 = arith.addf %38, %42 : vector<8x288xf32>
    %c8 = arith.constant 8 : index
    %c0_27 = arith.constant 0 : index
    %c0_28 = arith.constant 0 : index
    %44 = vector.load %arg2[%c8, %c0_27, %c0_28] : memref<9x8x4xf32, #tpu.memory_space<vmem>>, vector<1x8x4xf32>
    %45 = vector.shape_cast %44 : vector<1x8x4xf32> to vector<8x4xf32>
    %46 = vector.extract_strided_slice %2 {offsets = [0, 38], sizes = [4, 288], strides = [1, 1]} : vector<4x342xf32> to vector<4x288xf32>
    %cst_29 = arith.constant dense<0.000000e+00> : vector<8x288xf32>
    %47 = tpu.matmul %45, %46, %cst_29 {dimension_numbers = #tpu.dot_dimension_numbers<[1], [0], [0], [1], [0, 0, 1, 1], [], []>} : vector<8x4xf32>, vector<4x288xf32>, vector<8x288xf32> -> vector<8x288xf32>
    %48 = arith.addf %43, %47 : vector<8x288xf32>
    %c0_30 = arith.constant 0 : index
    %c0_31 = arith.constant 0 : index
    %49 = vector.load %arg3[%c0_30, %c0_31] : memref<8x1xf32, #tpu.memory_space<vmem>>, vector<8x1xf32>
    %50 = vector.broadcast %49 : vector<8x1xf32> to vector<8x288xf32>
    %51 = arith.addf %48, %50 : vector<8x288xf32>
    %cst_32 = arith.constant 0.000000e+00 : f32
    %52 = vector.broadcast %cst_32 : f32 to vector<8x288xf32>
    %53 = arith.maximumf %51, %52 : vector<8x288xf32>
    %54 = arith.truncf %53 : vector<8x288xf32> to vector<8x288xbf16>
    %c0_33 = arith.constant 0 : index
    %c0_34 = arith.constant 0 : index
    %c0_35 = arith.constant 0 : index
    %55 = vector.load %arg4[%c0_33, %c0_34, %c0_35] : memref<1x8x288xbf16, #tpu.memory_space<vmem>>, vector<1x8x288xbf16>
    %56 = vector.shape_cast %55 : vector<1x8x288xbf16> to vector<8x288xbf16>
    %57 = vector.shape_cast %54 : vector<8x288xbf16> to vector<1x8x288xbf16>
    tpu.vector_store %arg4[%c0_33, %c0_34, %c0_35], %57 {strides = array<i32>} : memref<1x8x288xbf16, #tpu.memory_space<vmem>>, vector<1x8x288xbf16>,
    return
  }
  func.func @transform_0(%arg0: i32) -> (i32, i32, i32) {
    %c0_i32 = arith.constant 0 : i32
    %c0_i32_0 = arith.constant 0 : i32
    %c0_i32_1 = arith.constant 0 : i32
    return %arg0, %c0_i32, %c0_i32_0 : i32, i32, i32
  }
  func.func @transform_1(%arg0: i32) -> (i32, i32, i32) {
    %c0_i32 = arith.constant 0 : i32
    %c0_i32_0 = arith.constant 0 : i32
    %c0_i32_1 = arith.constant 0 : i32
    %c0_i32_2 = arith.constant 0 : i32
    return %c0_i32, %c0_i32_0, %c0_i32_1 : i32, i32, i32
  }
  func.func @transform_2(%arg0: i32) -> (i32, i32) {
    %c0_i32 = arith.constant 0 : i32
    %c0_i32_0 = arith.constant 0 : i32
    %c0_i32_1 = arith.constant 0 : i32
    return %c0_i32, %c0_i32_0 : i32, i32
  }
  func.func @transform_3(%arg0: i32) -> (i32, i32, i32) {
    %c0_i32 = arith.constant 0 : i32
    %c0_i32_0 = arith.constant 0 : i32
    %c0_i32_1 = arith.constant 0 : i32
    return %arg0, %c0_i32, %c0_i32_0 : i32, i32, i32
  }
}

</mosaic_0001>

<llo_original>
// kernel: tpu_custom_call.1
$region0: #{tpu_custom_call.1}
  #allocation0 [shape = 'u32[]', space=smem, size = 0x4, offset = 0x4, fixed_abs, tag = 'smem constant byte address 0x4 - core index']
  #allocation1 [shape = 'u32[144,128]{1,0:T(1,128)}', space=vmem, size = 0x12000, scoped, tag = 'internal scratch']
  %s0 = inlined_call_operand.vmem [shape: bf16[2,4,342], index: 0, kind: input, shape index: {}]
  %s1 = inlined_call_operand.vmem [shape: f32[9,8,4], index: 1, kind: input, shape index: {}]
  %s2 = inlined_call_operand.vmem [shape: f32[8,1], index: 2, kind: input, shape index: {}]
  %s3 = inlined_call_operand.hbm [shape: bf16[2,8,288], index: 3, kind: output, shape index: {}]
  %s4 = sld [smem:[#allocation0]]
  $region45: #{tpu_custom_call.1} parent=0
    _
  %s6 = ssub.s32 1, %s4
  %s7 = scalar_select 0, %s6, %s4
  $region1: #{tpu_custom_call.1} parent=0
    #allocation2 [shape = 'u8[12288]{0}', space=vmem, size = 0x3000, scoped, tag = 'output window, operand 0']
    #allocation3 [shape = 's32[2]{0}', space=sflag, size = 0x8, scoped, tag = 'scoped memory for tpu_custom_call.1']
    %8 = vsyncpa [#allocation3], 0
    %s9 = scalar_lea.sflag [#allocation3], 1
    %10 = vsyncpa %s9, 0
    loop: start=0, step=1, limit=4
    $region2: #{tpu_custom_call.1} parent=1 // loop_pre_header
      _
    $region3: #{tpu_custom_call.1} parent=1 // loop_header
      %s12 = sphi 0, %s16
      %p13 = scmp.ge.s32.totalorder %s12, 4
      %s22 = sphi 0, %s24
      %s25 = sphi 0, %s22
      %s26 = sphi 0, %s25
      %s42 = sphi 0, %s26
      %s46 = sphi 0, %s46
      %s48 = sphi 0, %s46
      %s49 = sphi 0, %s48
      %s63 = sphi 0, %s49
      %s67 = sphi 0, %s67
      %s69 = sphi 0, %s67
      %s70 = sphi 0, %s69
      %s84 = sphi 0, %s70
      %s90 = sphi 0, %s92
      %s93 = sphi 0, %s90
      %s94 = sphi 0, %s93
      %s110 = sphi 0, %s94
    $region4: #{tpu_custom_call.1} parent=1 // loop_header_branch
      %15 = sbr.rel (%p13) target = $region8
    $region5: #{tpu_custom_call.1} parent=1 // loop_body
      %s17 = ssub.s32 %s12, 1
      %s18 = ssub.s32 %s12, 2
      %s19 = sadd.s32 %s12, 1
      %s20 = ssub.s32 %s12, %s19
      %p21 = scmp.eq.s32.totalorder %s20, 0
      %s23 = sadd.s32 %s22, 1
      %s24 = scalar_select %p21, %s22, %s23
      %p27 = pneg %p21
      %p28 = scmp.eq.s32.totalorder %s12, 1
      %p29 = por %p27, %p28
      %p30 = scmp.ne.s32.totalorder %s22, %s25
      %p31 = scmp.eq.s32.totalorder %s12, 0
      %p32 = por %p30, %p31
      %p33 = scmp.ne.s32.totalorder %s22, %s25
      %p34 = scmp.eq.s32.totalorder %s17, 1
      %p35 = por %p33, %p34
      %p36 = scmp.ne.s32.totalorder %s25, %s26
      %p37 = scmp.eq.s32.totalorder %s17, 0
      %p38 = por %p36, %p37
      %p39 = scmp.ne.s32.totalorder %s25, %s26
      %p40 = scmp.eq.s32.totalorder %s18, 1
      %p41 = por %p39, %p40
      %p43 = scmp.ne.s32.totalorder %s26, %s42
      %p44 = scmp.eq.s32.totalorder %s18, 0
      %p45 = por %p43, %p44
      %s47 = sadd.s32 %s46, 1
      %p50 = scmp.eq.s32.totalorder %s12, 1
      %p51 = scmp.ne.s32.totalorder %s46, %s48
      %p52 = scmp.eq.s32.totalorder %s12, 0
      %p53 = por %p51, %p52
      %p54 = scmp.ne.s32.totalorder %s46, %s48
      %p55 = scmp.eq.s32.totalorder %s17, 1
      %p56 = por %p54, %p55
      %p57 = scmp.ne.s32.totalorder %s48, %s49
      %p58 = scmp.eq.s32.totalorder %s17, 0
      %p59 = por %p57, %p58
      %p60 = scmp.ne.s32.totalorder %s48, %s49
      %p61 = scmp.eq.s32.totalorder %s18, 1
      %p62 = por %p60, %p61
      %p64 = scmp.ne.s32.totalorder %s49, %s63
      %p65 = scmp.eq.s32.totalorder %s18, 0
      %p66 = por %p64, %p65
      %s68 = sadd.s32 %s67, 1
      %p71 = scmp.eq.s32.totalorder %s12, 1
      %p72 = scmp.ne.s32.totalorder %s67, %s69
      %p73 = scmp.eq.s32.totalorder %s12, 0
      %p74 = por %p72, %p73
      %p75 = scmp.ne.s32.totalorder %s67, %s69
      %p76 = scmp.eq.s32.totalorder %s17, 1
      %p77 = por %p75, %p76
      %p78 = scmp.ne.s32.totalorder %s69, %s70
      %p79 = scmp.eq.s32.totalorder %s17, 0
      %p80 = por %p78, %p79
      %p81 = scmp.ne.s32.totalorder %s69, %s70
      %p82 = scmp.eq.s32.totalorder %s18, 1
      %p83 = por %p81, %p82
      %p85 = scmp.ne.s32.totalorder %s70, %s84
      %p86 = scmp.eq.s32.totalorder %s18, 0
      %p87 = por %p85, %p86
      %s88 = ssub.s32 %s12, %s19
      %p89 = scmp.eq.s32.totalorder %s88, 0
      %s91 = sadd.s32 %s90, 1
      %s92 = scalar_select %p89, %s90, %s91
      %p95 = pneg %p89
      %p96 = scmp.eq.s32.totalorder %s12, 1
      %p97 = por %p95, %p96
      %p98 = scmp.ne.s32.totalorder %s90, %s93
      %p99 = scmp.eq.s32.totalorder %s12, 0
      %p100 = por %p98, %p99
      %p101 = scmp.ne.s32.totalorder %s90, %s93
      %p102 = scmp.eq.s32.totalorder %s17, 1
      %p103 = por %p101, %p102
      %p104 = scmp.ne.s32.totalorder %s93, %s94
      %p105 = scmp.eq.s32.totalorder %s17, 0
      %p106 = por %p104, %p105
      %p107 = scmp.ne.s32.totalorder %s93, %s94
      %p108 = scmp.eq.s32.totalorder %s18, 1
      %p109 = por %p107, %p108
      %p111 = scmp.ne.s32.totalorder %s94, %s110
      %p112 = scmp.eq.s32.totalorder %s18, 0
      %p113 = por %p111, %p112
      %p114 = scmp.le.s32.totalorder 1, %s12
      %p115 = scmp.lt.s32.totalorder %s12, 3
      %p116 = pnand %p114, %p115
      %p117 = pneg %p116
      // Predicated region
      $region9: #{tpu_custom_call.1} parent=5 // pred_check
        _
      $region10: #{tpu_custom_call.1} parent=5 // pred_check_branch
        %119 = sbr.rel (%p116) target = $region12
      $region11: #{tpu_custom_call.1} parent=5 // pred_region
        %s120 = ssub.s32 %s12, 1
        // Predicated region
        $region13: #{tpu_custom_call.1} parent=11 // pred_check
          %p121 = pneg %p59
        $region14: #{tpu_custom_call.1} parent=11 // pred_check_branch
          %123 = sbr.rel (%p121) target = $region16
        $region15: #{tpu_custom_call.1} parent=11 // pred_region
          _
        $region16: #{tpu_custom_call.1} parent=11 // pred_fallthru
          _
        // Predicated region
        $region17: #{tpu_custom_call.1} parent=11 // pred_check
          %p124 = pneg %p80
        $region18: #{tpu_custom_call.1} parent=11 // pred_check_branch
          %126 = sbr.rel (%p124) target = $region20
        $region19: #{tpu_custom_call.1} parent=11 // pred_region
          _
        $region20: #{tpu_custom_call.1} parent=11 // pred_fallthru
          _
      $region12: #{tpu_custom_call.1} parent=5 // pred_fallthru
        _
      %p127 = scmp.lt.s32.totalorder %s12, 2
      // Predicated region
      $region21: #{tpu_custom_call.1} parent=5 // pred_check
        %p128 = pneg %p127
      $region22: #{tpu_custom_call.1} parent=5 // pred_check_branch
        %130 = sbr.rel (%p128) target = $region24
      $region23: #{tpu_custom_call.1} parent=5 // pred_region
        // Predicated region
        $region25: #{tpu_custom_call.1} parent=23 // pred_check
          %p131 = pneg %p32
        $region26: #{tpu_custom_call.1} parent=23 // pred_check_branch
          %133 = sbr.rel (%p131) target = $region28
        $region27: #{tpu_custom_call.1} parent=23 // pred_region
          %p134 = scmp.lt.s32.totalorder %s12, 1
          %s135 = scalar_select %p134, %s12, 1
          %s136 = smul.addr %s135, 3
          %s137 = smul.addr %s136, 2
          %s138 = scalar_lea.vmem %s0, %s137
        $region28: #{tpu_custom_call.1} parent=23 // pred_fallthru
          _
      $region24: #{tpu_custom_call.1} parent=5 // pred_fallthru
        _
      %p139 = scmp.le.s32.totalorder 1, %s12
      %p140 = scmp.lt.s32.totalorder %s12, 3
      %p141 = pnand %p139, %p140
      %p142 = pneg %p141
      // Predicated region
      $region29: #{tpu_custom_call.1} parent=5 // pred_check
        _
      $region30: #{tpu_custom_call.1} parent=5 // pred_check_branch
        %144 = sbr.rel (%p141) target = $region32
      $region31: #{tpu_custom_call.1} parent=5 // pred_region
        %s145 = ssub.s32 %s12, 1
        %p146 = scmp.lt.s32.totalorder %s17, 1
        %s147 = scalar_select %p146, %s17, 1
        %s148 = smul.addr %s147, 3
        %s149 = smul.addr %s148, 2
        %s150 = scalar_lea.vmem %s0, %s149
        %p151 = pneg %p38
        %p152 = pneg %p35
        %p153 = pneg %p59
        %p154 = pneg %p56
        %p155 = pneg %p80
        %p156 = pneg %p77
        %p157 = pneg %p106
        %p158 = pneg %p103
        %s159 = sand.u32 %s93, 1
        %s160 = scalar_lea.sflag [#allocation3], %s159
        %s161 = sand.u32 %s93, 1
        %s162 = smul.addr %s161, 12
        %s163 = scalar_lea.vmem [#allocation2], %s162
        %p164 = scmp.lt.s32.totalorder %s17, 1
        %s165 = scalar_select %p164, %s17, 1
        %s166 = smul.addr %s165, 3
        %s167 = smul.addr %s166, 2
        %s168 = scalar_lea.vmem %s0, %s167
        %v169 = vld [vmem:[%s168] sm:$0x3f]
        %v170 = vunpack.c.l.bf16 %v169
        %v171 = vunpack.c.h.bf16 %v169
        %v172 = vld [vmem:[%s1] sm:$0xff]
        %s173 = scalar_lea.vmem %s1, 8
        %v174 = vld [vmem:[%s173] sm:$0xff]
        %v177 = vcombine.high %v170, %v170
        %178 = vrot.lane.b32.xlu0 %v170, 127
        %v179 = vpop.permute.xlu0 %178
        %180 = vrot.lane.b32.xlu0 %v177, 127
        %v181 = vpop.permute.xlu0 %180
        %182 = vrot.lane.b32.xlu0 %v171, 127
        %v183 = vpop.permute.xlu0 %182
        %vm184 = vcmask 1039360
        %v185 = vsel %vm184, %v179, %v181
        %v186 = vsel %vm184, %v181, %v183
        %vm187 = vcmask 31744
        %v189 = vsel %vm187, %v174, 0
        %vm191 = vcmask 1043456
        %v192 = vsel %vm191, %v185, 0
        %v194 = vsel %vm191, %v186, 0
        %v196 = vsel %vm191, %v183, 0
        %198 = vmatprep.subr.mxu0 0.0
        %199 = vmatpush1.msra.mxu0 0.0
        %200 = vmatprep.subr.mxu0 0.0
        %201 = vmatpush1.msra.mxu0 0.0
        %202 = vmatprep.subr.mxu0 0.0
        %203 = vmatpush1.msra.mxu0 0.0
        %204 = vmatprep.subr.mxu0 0.0
        %205 = vmatpush1.msra.mxu0 0.0
        %206 = vmatprep.subr.mxu0 0.0
        %207 = vmatpush1.msra.mxu0 0.0
        %208 = vmatprep.subr.mxu0 0.0
        %209 = vmatpush1.msra.mxu0 0.0
        %210 = vmatprep.subr.mxu0 0.0
        %211 = vmatpush1.msra.mxu0 0.0
        %212 = vmatprep.subr.mxu0 0.0
        %213 = vmatpush1.msra.mxu0 0.0
        %214 = vmatprep.subr.mxu0 0.0
        %215 = vmatpush1.msra.mxu0 0.0
        %216 = vmatprep.subr.mxu0 0.0
        %217 = vmatpush1.msra.mxu0 0.0
        %218 = vmatprep.subr.mxu0 0.0
        %219 = vmatpush1.msra.mxu0 0.0
        %220 = vmatprep.subr.mxu0 0.0
        %221 = vmatpush1.msra.mxu0 0.0
        %222 = vmatprep.subr.mxu0 0.0
        %223 = vmatpush1.msra.mxu0 0.0
        %224 = vmatprep.subr.mxu0 0.0
        %225 = vmatpush1.msra.mxu0 0.0
        %226 = vmatprep.subr.mxu0 0.0
        %227 = vmatpush1.msra.mxu0 0.0
        %228 = vmatprep.subr.mxu0 %v194
        %229 = vmatpush1.msra.mxu0 %v192
        %230 = vmatprep.subr.mxu0 0.0
        %231 = vmatpush2.msra.mxu0 0.0
        %232 = vmatprep.subr.mxu0 0.0
        %233 = vmatpush2.msra.mxu0 0.0
        %234 = vmatprep.subr.mxu0 0.0
        %235 = vmatpush2.msra.mxu0 0.0
        %236 = vmatprep.subr.mxu0 0.0
        %237 = vmatpush2.msra.mxu0 0.0
        %238 = vmatprep.subr.mxu0 0.0
        %239 = vmatpush2.msra.mxu0 0.0
        %240 = vmatprep.subr.mxu0 0.0
        %241 = vmatpush2.msra.mxu0 0.0
        %242 = vmatprep.subr.mxu0 0.0
        %243 = vmatpush2.msra.mxu0 0.0
        %244 = vmatprep.subr.mxu0 0.0
        %245 = vmatpush2.msra.mxu0 0.0
        %246 = vmatprep.subr.mxu0 0.0
        %247 = vmatpush2.msra.mxu0 0.0
        %248 = vmatprep.subr.mxu0 0.0
        %249 = vmatpush2.msra.mxu0 0.0
        %250 = vmatprep.subr.mxu0 0.0
        %251 = vmatpush2.msra.mxu0 0.0
        %252 = vmatprep.subr.mxu0 0.0
        %253 = vmatpush2.msra.mxu0 0.0
        %254 = vmatprep.subr.mxu0 0.0
        %255 = vmatpush2.msra.mxu0 0.0
        %256 = vmatprep.subr.mxu0 0.0
        %257 = vmatpush2.msra.mxu0 0.0
        %258 = vmatprep.subr.mxu0 0.0
        %259 = vmatpush2.msra.mxu0 0.0
        %260 = vmatprep.subr.mxu0 0.0
        %261 = vmatpush2.msra.mxu0 0.0
        %262 = vmatprep.mubr.f32.mxu0 0.0
        %263 = vmatmul.mubr.f32.gmra.mxu0 %v189
        %v264 = vpop.f32.mrf.mxu0
        %v265 = vadd.f32 0.0, %v264
        %v266 = vpop.f32.mrf.mxu0
        %v267 = vadd.f32 0.0, %v266
        %268 = vdwg.mxu0
        %269 = vmatprep.subr.mxu0 0.0
        %270 = vmatpush1.msra.mxu0 0.0
        %271 = vmatprep.subr.mxu0 0.0
        %272 = vmatpush1.msra.mxu0 0.0
        %273 = vmatprep.subr.mxu0 0.0
        %274 = vmatpush1.msra.mxu0 0.0
        %275 = vmatprep.subr.mxu0 0.0
        %276 = vmatpush1.msra.mxu0 0.0
        %277 = vmatprep.subr.mxu0 0.0
        %278 = vmatpush1.msra.mxu0 0.0
        %279 = vmatprep.subr.mxu0 0.0
        %280 = vmatpush1.msra.mxu0 0.0
        %281 = vmatprep.subr.mxu0 0.0
        %282 = vmatpush1.msra.mxu0 0.0
        %283 = vmatprep.subr.mxu0 0.0
        %284 = vmatpush1.msra.mxu0 0.0
        %285 = vmatprep.subr.mxu0 0.0
        %286 = vmatpush1.msra.mxu0 0.0
        %287 = vmatprep.subr.mxu0 0.0
        %288 = vmatpush1.msra.mxu0 0.0
        %289 = vmatprep.subr.mxu0 0.0
        %290 = vmatpush1.msra.mxu0 0.0
        %291 = vmatprep.subr.mxu0 0.0
        %292 = vmatpush1.msra.mxu0 0.0
        %293 = vmatprep.subr.mxu0 0.0
        %294 = vmatpush1.msra.mxu0 0.0
        %295 = vmatprep.subr.mxu0 0.0
        %296 = vmatpush1.msra.mxu0 0.0
        %297 = vmatprep.subr.mxu0 0.0
        %298 = vmatpush1.msra.mxu0 0.0
        %299 = vmatprep.subr.mxu0 0.0
        %300 = vmatpush1.msra.mxu0 %v196
        %301 = vmatprep.subr.mxu0 0.0
        %302 = vmatpush2.msra.mxu0 0.0
        %303 = vmatprep.subr.mxu0 0.0
        %304 = vmatpush2.msra.mxu0 0.0
        %305 = vmatprep.subr.mxu0 0.0
        %306 = vmatpush2.msra.mxu0 0.0
        %307 = vmatprep.subr.mxu0 0.0
        %308 = vmatpush2.msra.mxu0 0.0
        %309 = vmatprep.subr.mxu0 0.0
        %310 = vmatpush2.msra.mxu0 0.0
        %311 = vmatprep.subr.mxu0 0.0
        %312 = vmatpush2.msra.mxu0 0.0
        %313 = vmatprep.subr.mxu0 0.0
        %314 = vmatpush2.msra.mxu0 0.0
        %315 = vmatprep.subr.mxu0 0.0
        %316 = vmatpush2.msra.mxu0 0.0
        %317 = vmatprep.subr.mxu0 0.0
        %318 = vmatpush2.msra.mxu0 0.0
        %319 = vmatprep.subr.mxu0 0.0
        %320 = vmatpush2.msra.mxu0 0.0
        %321 = vmatprep.subr.mxu0 0.0
        %322 = vmatpush2.msra.mxu0 0.0
        %323 = vmatprep.subr.mxu0 0.0
        %324 = vmatpush2.msra.mxu0 0.0
        %325 = vmatprep.subr.mxu0 0.0
        %326 = vmatpush2.msra.mxu0 0.0
        %327 = vmatprep.subr.mxu0 0.0
        %328 = vmatpush2.msra.mxu0 0.0
        %329 = vmatprep.subr.mxu0 0.0
        %330 = vmatpush2.msra.mxu0 0.0
        %331 = vmatprep.subr.mxu0 0.0
        %332 = vmatpush2.msra.mxu0 0.0
        %333 = vmatprep.mubr.f32.mxu0 0.0
        %334 = vmatmul.mubr.f32.gmra.mxu0 %v189
        %v335 = vpop.f32.mrf.mxu0
        %v336 = vadd.f32 0.0, %v335
        %v337 = vpop.f32.mrf.mxu0
        %338 = vdwg.mxu0
        %v340 = vsel %vm187, %v172, 0
        %v342 = vsel %vm191, %v170, 0
        %v344 = vsel %vm191, %v177, 0
        %v346 = vsel %vm191, %v171, 0
        %348 = vmatprep.subr.mxu0 0.0
        %349 = vmatpush1.msra.mxu0 0.0
        %350 = vmatprep.subr.mxu0 0.0
        %351 = vmatpush1.msra.mxu0 0.0
        %352 = vmatprep.subr.mxu0 0.0
        %353 = vmatpush1.msra.mxu0 0.0
        %354 = vmatprep.subr.mxu0 0.0
        %355 = vmatpush1.msra.mxu0 0.0
        %356 = vmatprep.subr.mxu0 0.0
        %357 = vmatpush1.msra.mxu0 0.0
        %358 = vmatprep.subr.mxu0 0.0
        %359 = vmatpush1.msra.mxu0 0.0
        %360 = vmatprep.subr.mxu0 0.0
        %361 = vmatpush1.msra.mxu0 0.0
        %362 = vmatprep.subr.mxu0 0.0
        %363 = vmatpush1.msra.mxu0 0.0
        %364 = vmatprep.subr.mxu0 0.0
        %365 = vmatpush1.msra.mxu0 0.0
        %366 = vmatprep.subr.mxu0 0.0
        %367 = vmatpush1.msra.mxu0 0.0
        %368 = vmatprep.subr.mxu0 0.0
        %369 = vmatpush1.msra.mxu0 0.0
        %370 = vmatprep.subr.mxu0 0.0
        %371 = vmatpush1.msra.mxu0 0.0
        %372 = vmatprep.subr.mxu0 0.0
        %373 = vmatpush1.msra.mxu0 0.0
        %374 = vmatprep.subr.mxu0 0.0
        %375 = vmatpush1.msra.mxu0 0.0
        %376 = vmatprep.subr.mxu0 0.0
        %377 = vmatpush1.msra.mxu0 0.0
        %378 = vmatprep.subr.mxu0 %v344
        %379 = vmatpush1.msra.mxu0 %v342
        %380 = vmatprep.subr.mxu0 0.0
        %381 = vmatpush2.msra.mxu0 0.0
        %382 = vmatprep.subr.mxu0 0.0
        %383 = vmatpush2.msra.mxu0 0.0
        %384 = vmatprep.subr.mxu0 0.0
        %385 = vmatpush2.msra.mxu0 0.0
        %386 = vmatprep.subr.mxu0 0.0
        %387 = vmatpush2.msra.mxu0 0.0
        %388 = vmatprep.subr.mxu0 0.0
        %389 = vmatpush2.msra.mxu0 0.0
        %390 = vmatprep.subr.mxu0 0.0
        %391 = vmatpush2.msra.mxu0 0.0
        %392 = vmatprep.subr.mxu0 0.0
        %393 = vmatpush2.msra.mxu0 0.0
        %394 = vmatprep.subr.mxu0 0.0
        %395 = vmatpush2.msra.mxu0 0.0
        %396 = vmatprep.subr.mxu0 0.0
        %397 = vmatpush2.msra.mxu0 0.0
        %398 = vmatprep.subr.mxu0 0.0
        %399 = vmatpush2.msra.mxu0 0.0
        %400 = vmatprep.subr.mxu0 0.0
        %401 = vmatpush2.msra.mxu0 0.0
        %402 = vmatprep.subr.mxu0 0.0
        %403 = vmatpush2.msra.mxu0 0.0
        %404 = vmatprep.subr.mxu0 0.0
        %405 = vmatpush2.msra.mxu0 0.0
        %406 = vmatprep.subr.mxu0 0.0
        %407 = vmatpush2.msra.mxu0 0.0
        %408 = vmatprep.subr.mxu0 0.0
        %409 = vmatpush2.msra.mxu0 0.0
        %410 = vmatprep.subr.mxu0 0.0
        %411 = vmatpush2.msra.mxu0 0.0
        %412 = vmatprep.mubr.f32.mxu0 0.0
        %413 = vmatmul.mubr.f32.gmra.mxu0 %v340
        %v414 = vpop.f32.mrf.mxu0
        %v415 = vadd.f32 %v265, %v414
        %v416 = vpop.f32.mrf.mxu0
        %v417 = vadd.f32 %v267, %v416
        %418 = vdwg.mxu0
        %419 = vmatprep.subr.mxu0 0.0
        %420 = vmatpush1.msra.mxu0 0.0
        %421 = vmatprep.subr.mxu0 0.0
        %422 = vmatpush1.msra.mxu0 0.0
        %423 = vmatprep.subr.mxu0 0.0
        %424 = vmatpush1.msra.mxu0 0.0
        %425 = vmatprep.subr.mxu0 0.0
        %426 = vmatpush1.msra.mxu0 0.0
        %427 = vmatprep.subr.mxu0 0.0
        %428 = vmatpush1.msra.mxu0 0.0
        %429 = vmatprep.subr.mxu0 0.0
        %430 = vmatpush1.msra.mxu0 0.0
        %431 = vmatprep.subr.mxu0 0.0
        %432 = vmatpush1.msra.mxu0 0.0
        %433 = vmatprep.subr.mxu0 0.0
        %434 = vmatpush1.msra.mxu0 0.0
        %435 = vmatprep.subr.mxu0 0.0
        %436 = vmatpush1.msra.mxu0 0.0
        %437 = vmatprep.subr.mxu0 0.0
        %438 = vmatpush1.msra.mxu0 0.0
        %439 = vmatprep.subr.mxu0 0.0
        %440 = vmatpush1.msra.mxu0 0.0
        %441 = vmatprep.subr.mxu0 0.0
        %442 = vmatpush1.msra.mxu0 0.0
        %443 = vmatprep.subr.mxu0 0.0
        %444 = vmatpush1.msra.mxu0 0.0
        %445 = vmatprep.subr.mxu0 0.0
        %446 = vmatpush1.msra.mxu0 0.0
        %447 = vmatprep.subr.mxu0 0.0
        %448 = vmatpush1.msra.mxu0 0.0
        %449 = vmatprep.subr.mxu0 0.0
        %450 = vmatpush1.msra.mxu0 %v346
        %451 = vmatprep.subr.mxu0 0.0
        %452 = vmatpush2.msra.mxu0 0.0
        %453 = vmatprep.subr.mxu0 0.0
        %454 = vmatpush2.msra.mxu0 0.0
        %455 = vmatprep.subr.mxu0 0.0
        %456 = vmatpush2.msra.mxu0 0.0
        %457 = vmatprep.subr.mxu0 0.0
        %458 = vmatpush2.msra.mxu0 0.0
        %459 = vmatprep.subr.mxu0 0.0
        %460 = vmatpush2.msra.mxu0 0.0
        %461 = vmatprep.subr.mxu0 0.0
        %462 = vmatpush2.msra.mxu0 0.0
        %463 = vmatprep.subr.mxu0 0.0
        %464 = vmatpush2.msra.mxu0 0.0
        %465 = vmatprep.subr.mxu0 0.0
        %466 = vmatpush2.msra.mxu0 0.0
        %467 = vmatprep.subr.mxu0 0.0
        %468 = vmatpush2.msra.mxu0 0.0
        %469 = vmatprep.subr.mxu0 0.0
        %470 = vmatpush2.msra.mxu0 0.0
        %471 = vmatprep.subr.mxu0 0.0
        %472 = vmatpush2.msra.mxu0 0.0
        %473 = vmatprep.subr.mxu0 0.0
        %474 = vmatpush2.msra.mxu0 0.0
        %475 = vmatprep.subr.mxu0 0.0
        %476 = vmatpush2.msra.mxu0 0.0
        %477 = vmatprep.subr.mxu0 0.0
        %478 = vmatpush2.msra.mxu0 0.0
        %479 = vmatprep.subr.mxu0 0.0
        %480 = vmatpush2.msra.mxu0 0.0
        %481 = vmatprep.subr.mxu0 0.0
        %482 = vmatpush2.msra.mxu0 0.0
        %483 = vmatprep.mubr.f32.mxu0 0.0
        %484 = vmatmul.mubr.f32.gmra.mxu0 %v340
        %v485 = vpop.f32.mrf.mxu0
        %v486 = vadd.f32 %v336, %v485
        %v487 = vpop.f32.mrf.mxu0
        %488 = vdwg.mxu0
        %s489 = scalar_lea.vmem %s1, 16
        %v490 = vld [vmem:[%s489] sm:$0xff]
        %491 = vrot.lane.b32.xlu0 %v170, 126
        %v492 = vpop.permute.xlu0 %491
        %493 = vrot.lane.b32.xlu0 %v177, 126
        %v494 = vpop.permute.xlu0 %493
        %495 = vrot.lane.b32.xlu0 %v171, 126
        %v496 = vpop.permute.xlu0 %495
        %vm497 = vcmask 1031168
        %v498 = vsel %vm497, %v492, %v494
        %v499 = vsel %vm497, %v494, %v496
        %v501 = vsel %vm187, %v490, 0
        %v503 = vsel %vm191, %v498, 0
        %v505 = vsel %vm191, %v499, 0
        %v507 = vsel %vm191, %v496, 0
        %509 = vmatprep.subr.mxu0 0.0
        %510 = vmatpush1.msra.mxu0 0.0
        %511 = vmatprep.subr.mxu0 0.0
        %512 = vmatpush1.msra.mxu0 0.0
        %513 = vmatprep.subr.mxu0 0.0
        %514 = vmatpush1.msra.mxu0 0.0
        %515 = vmatprep.subr.mxu0 0.0
        %516 = vmatpush1.msra.mxu0 0.0
        %517 = vmatprep.subr.mxu0 0.0
        %518 = vmatpush1.msra.mxu0 0.0
        %519 = vmatprep.subr.mxu0 0.0
        %520 = vmatpush1.msra.mxu0 0.0
        %521 = vmatprep.subr.mxu0 0.0
        %522 = vmatpush1.msra.mxu0 0.0
        %523 = vmatprep.subr.mxu0 0.0
        %524 = vmatpush1.msra.mxu0 0.0
        %525 = vmatprep.subr.mxu0 0.0
        %526 = vmatpush1.msra.mxu0 0.0
        %527 = vmatprep.subr.mxu0 0.0
        %528 = vmatpush1.msra.mxu0 0.0
        %529 = vmatprep.subr.mxu0 0.0
        %530 = vmatpush1.msra.mxu0 0.0
        %531 = vmatprep.subr.mxu0 0.0
        %532 = vmatpush1.msra.mxu0 0.0
        %533 = vmatprep.subr.mxu0 0.0
        %534 = vmatpush1.msra.mxu0 0.0
        %535 = vmatprep.subr.mxu0 0.0
        %536 = vmatpush1.msra.mxu0 0.0
        %537 = vmatprep.subr.mxu0 0.0
        %538 = vmatpush1.msra.mxu0 0.0
        %539 = vmatprep.subr.mxu0 %v505
        %540 = vmatpush1.msra.mxu0 %v503
        %541 = vmatprep.subr.mxu0 0.0
        %542 = vmatpush2.msra.mxu0 0.0
        %543 = vmatprep.subr.mxu0 0.0
        %544 = vmatpush2.msra.mxu0 0.0
        %545 = vmatprep.subr.mxu0 0.0
        %546 = vmatpush2.msra.mxu0 0.0
        %547 = vmatprep.subr.mxu0 0.0
        %548 = vmatpush2.msra.mxu0 0.0
        %549 = vmatprep.subr.mxu0 0.0
        %550 = vmatpush2.msra.mxu0 0.0
        %551 = vmatprep.subr.mxu0 0.0
        %552 = vmatpush2.msra.mxu0 0.0
        %553 = vmatprep.subr.mxu0 0.0
        %554 = vmatpush2.msra.mxu0 0.0
        %555 = vmatprep.subr.mxu0 0.0
        %556 = vmatpush2.msra.mxu0 0.0
        %557 = vmatprep.subr.mxu0 0.0
        %558 = vmatpush2.msra.mxu0 0.0
        %559 = vmatprep.subr.mxu0 0.0
        %560 = vmatpush2.msra.mxu0 0.0
        %561 = vmatprep.subr.mxu0 0.0
        %562 = vmatpush2.msra.mxu0 0.0
        %563 = vmatprep.subr.mxu0 0.0
        %564 = vmatpush2.msra.mxu0 0.0
        %565 = vmatprep.subr.mxu0 0.0
        %566 = vmatpush2.msra.mxu0 0.0
        %567 = vmatprep.subr.mxu0 0.0
        %568 = vmatpush2.msra.mxu0 0.0
        %569 = vmatprep.subr.mxu0 0.0
        %570 = vmatpush2.msra.mxu0 0.0
        %571 = vmatprep.subr.mxu0 0.0
        %572 = vmatpush2.msra.mxu0 0.0
        %573 = vmatprep.mubr.f32.mxu0 0.0
        %574 = vmatmul.mubr.f32.gmra.mxu0 %v501
        %v575 = vpop.f32.mrf.mxu0
        %v576 = vadd.f32 0.0, %v575
        %v577 = vpop.f32.mrf.mxu0
        %v578 = vadd.f32 0.0, %v577
        %579 = vdwg.mxu0
        %580 = vmatprep.subr.mxu0 0.0
        %581 = vmatpush1.msra.mxu0 0.0
        %582 = vmatprep.subr.mxu0 0.0
        %583 = vmatpush1.msra.mxu0 0.0
        %584 = vmatprep.subr.mxu0 0.0
        %585 = vmatpush1.msra.mxu0 0.0
        %586 = vmatprep.subr.mxu0 0.0
        %587 = vmatpush1.msra.mxu0 0.0
        %588 = vmatprep.subr.mxu0 0.0
        %589 = vmatpush1.msra.mxu0 0.0
        %590 = vmatprep.subr.mxu0 0.0
        %591 = vmatpush1.msra.mxu0 0.0
        %592 = vmatprep.subr.mxu0 0.0
        %593 = vmatpush1.msra.mxu0 0.0
        %594 = vmatprep.subr.mxu0 0.0
        %595 = vmatpush1.msra.mxu0 0.0
        %596 = vmatprep.subr.mxu0 0.0
        %597 = vmatpush1.msra.mxu0 0.0
        %598 = vmatprep.subr.mxu0 0.0
        %599 = vmatpush1.msra.mxu0 0.0
        %600 = vmatprep.subr.mxu0 0.0
        %601 = vmatpush1.msra.mxu0 0.0
        %602 = vmatprep.subr.mxu0 0.0
        %603 = vmatpush1.msra.mxu0 0.0
        %604 = vmatprep.subr.mxu0 0.0
        %605 = vmatpush1.msra.mxu0 0.0
        %606 = vmatprep.subr.mxu0 0.0
        %607 = vmatpush1.msra.mxu0 0.0
        %608 = vmatprep.subr.mxu0 0.0
        %609 = vmatpush1.msra.mxu0 0.0
        %610 = vmatprep.subr.mxu0 0.0
        %611 = vmatpush1.msra.mxu0 %v507
        %612 = vmatprep.subr.mxu0 0.0
        %613 = vmatpush2.msra.mxu0 0.0
        %614 = vmatprep.subr.mxu0 0.0
        %615 = vmatpush2.msra.mxu0 0.0
        %616 = vmatprep.subr.mxu0 0.0
        %617 = vmatpush2.msra.mxu0 0.0
        %618 = vmatprep.subr.mxu0 0.0
        %619 = vmatpush2.msra.mxu0 0.0
        %620 = vmatprep.subr.mxu0 0.0
        %621 = vmatpush2.msra.mxu0 0.0
        %622 = vmatprep.subr.mxu0 0.0
        %623 = vmatpush2.msra.mxu0 0.0
        %624 = vmatprep.subr.mxu0 0.0
        %625 = vmatpush2.msra.mxu0 0.0
        %626 = vmatprep.subr.mxu0 0.0
        %627 = vmatpush2.msra.mxu0 0.0
        %628 = vmatprep.subr.mxu0 0.0
        %629 = vmatpush2.msra.mxu0 0.0
        %630 = vmatprep.subr.mxu0 0.0
        %631 = vmatpush2.msra.mxu0 0.0
        %632 = vmatprep.subr.mxu0 0.0
        %633 = vmatpush2.msra.mxu0 0.0
        %634 = vmatprep.subr.mxu0 0.0
        %635 = vmatpush2.msra.mxu0 0.0
        %636 = vmatprep.subr.mxu0 0.0
        %637 = vmatpush2.msra.mxu0 0.0
        %638 = vmatprep.subr.mxu0 0.0
        %639 = vmatpush2.msra.mxu0 0.0
        %640 = vmatprep.subr.mxu0 0.0
        %641 = vmatpush2.msra.mxu0 0.0
        %642 = vmatprep.subr.mxu0 0.0
        %643 = vmatpush2.msra.mxu0 0.0
        %644 = vmatprep.mubr.f32.mxu0 0.0
        %645 = vmatmul.mubr.f32.gmra.mxu0 %v501
        %v646 = vpop.f32.mrf.mxu0
        %v647 = vadd.f32 0.0, %v646
        %v648 = vpop.f32.mrf.mxu0
        %649 = vdwg.mxu0
        %v650 = vadd.f32 %v415, %v576
        %v651 = vadd.f32 %v417, %v578
        %v652 = vadd.f32 %v486, %v647
        %s653 = scalar_lea.vmem %s1, 24
        %v654 = vld [vmem:[%s653] sm:$0xff]
        %655 = vrot.lane.b32.xlu0 %v170, 110
        %v656 = vpop.permute.xlu0 %655
        %657 = vrot.lane.b32.xlu0 %v177, 110
        %v658 = vpop.permute.xlu0 %657
        %659 = vrot.lane.b32.xlu0 %v171, 110
        %v660 = vpop.permute.xlu0 %659
        %vm661 = vcmask 900096
        %v662 = vsel %vm661, %v656, %v658
        %v663 = vsel %vm661, %v658, %v660
        %v665 = vsel %vm187, %v654, 0
        %v667 = vsel %vm191, %v662, 0
        %v669 = vsel %vm191, %v663, 0
        %v671 = vsel %vm191, %v660, 0
        %673 = vmatprep.subr.mxu0 0.0
        %674 = vmatpush1.msra.mxu0 0.0
        %675 = vmatprep.subr.mxu0 0.0
        %676 = vmatpush1.msra.mxu0 0.0
        %677 = vmatprep.subr.mxu0 0.0
        %678 = vmatpush1.msra.mxu0 0.0
        %679 = vmatprep.subr.mxu0 0.0
        %680 = vmatpush1.msra.mxu0 0.0
        %681 = vmatprep.subr.mxu0 0.0
        %682 = vmatpush1.msra.mxu0 0.0
        %683 = vmatprep.subr.mxu0 0.0
        %684 = vmatpush1.msra.mxu0 0.0
        %685 = vmatprep.subr.mxu0 0.0
        %686 = vmatpush1.msra.mxu0 0.0
        %687 = vmatprep.subr.mxu0 0.0
        %688 = vmatpush1.msra.mxu0 0.0
        %689 = vmatprep.subr.mxu0 0.0
        %690 = vmatpush1.msra.mxu0 0.0
        %691 = vmatprep.subr.mxu0 0.0
        %692 = vmatpush1.msra.mxu0 0.0
        %693 = vmatprep.subr.mxu0 0.0
        %694 = vmatpush1.msra.mxu0 0.0
        %695 = vmatprep.subr.mxu0 0.0
        %696 = vmatpush1.msra.mxu0 0.0
        %697 = vmatprep.subr.mxu0 0.0
        %698 = vmatpush1.msra.mxu0 0.0
        %699 = vmatprep.subr.mxu0 0.0
        %700 = vmatpush1.msra.mxu0 0.0
        %701 = vmatprep.subr.mxu0 0.0
        %702 = vmatpush1.msra.mxu0 0.0
        %703 = vmatprep.subr.mxu0 %v669
        %704 = vmatpush1.msra.mxu0 %v667
        %705 = vmatprep.subr.mxu0 0.0
        %706 = vmatpush2.msra.mxu0 0.0
        %707 = vmatprep.subr.mxu0 0.0
        %708 = vmatpush2.msra.mxu0 0.0
        %709 = vmatprep.subr.mxu0 0.0
        %710 = vmatpush2.msra.mxu0 0.0
        %711 = vmatprep.subr.mxu0 0.0
        %712 = vmatpush2.msra.mxu0 0.0
        %713 = vmatprep.subr.mxu0 0.0
        %714 = vmatpush2.msra.mxu0 0.0
        %715 = vmatprep.subr.mxu0 0.0
        %716 = vmatpush2.msra.mxu0 0.0
        %717 = vmatprep.subr.mxu0 0.0
        %718 = vmatpush2.msra.mxu0 0.0
        %719 = vmatprep.subr.mxu0 0.0
        %720 = vmatpush2.msra.mxu0 0.0
        %721 = vmatprep.subr.mxu0 0.0
        %722 = vmatpush2.msra.mxu0 0.0
        %723 = vmatprep.subr.mxu0 0.0
        %724 = vmatpush2.msra.mxu0 0.0
        %725 = vmatprep.subr.mxu0 0.0
        %726 = vmatpush2.msra.mxu0 0.0
        %727 = vmatprep.subr.mxu0 0.0
        %728 = vmatpush2.msra.mxu0 0.0
        %729 = vmatprep.subr.mxu0 0.0
        %730 = vmatpush2.msra.mxu0 0.0
        %731 = vmatprep.subr.mxu0 0.0
        %732 = vmatpush2.msra.mxu0 0.0
        %733 = vmatprep.subr.mxu0 0.0
        %734 = vmatpush2.msra.mxu0 0.0
        %735 = vmatprep.subr.mxu0 0.0
        %736 = vmatpush2.msra.mxu0 0.0
        %737 = vmatprep.mubr.f32.mxu0 0.0
        %738 = vmatmul.mubr.f32.gmra.mxu0 %v665
        %v739 = vpop.f32.mrf.mxu0
        %v740 = vadd.f32 0.0, %v739
        %v741 = vpop.f32.mrf.mxu0
        %v742 = vadd.f32 0.0, %v741
        %743 = vdwg.mxu0
        %744 = vmatprep.subr.mxu0 0.0
        %745 = vmatpush1.msra.mxu0 0.0
        %746 = vmatprep.subr.mxu0 0.0
        %747 = vmatpush1.msra.mxu0 0.0
        %748 = vmatprep.subr.mxu0 0.0
        %749 = vmatpush1.msra.mxu0 0.0
        %750 = vmatprep.subr.mxu0 0.0
        %751 = vmatpush1.msra.mxu0 0.0
        %752 = vmatprep.subr.mxu0 0.0
        %753 = vmatpush1.msra.mxu0 0.0
        %754 = vmatprep.subr.mxu0 0.0
        %755 = vmatpush1.msra.mxu0 0.0
        %756 = vmatprep.subr.mxu0 0.0
        %757 = vmatpush1.msra.mxu0 0.0
        %758 = vmatprep.subr.mxu0 0.0
        %759 = vmatpush1.msra.mxu0 0.0
        %760 = vmatprep.subr.mxu0 0.0
        %761 = vmatpush1.msra.mxu0 0.0
        %762 = vmatprep.subr.mxu0 0.0
        %763 = vmatpush1.msra.mxu0 0.0
        %764 = vmatprep.subr.mxu0 0.0
        %765 = vmatpush1.msra.mxu0 0.0
        %766 = vmatprep.subr.mxu0 0.0
        %767 = vmatpush1.msra.mxu0 0.0
        %768 = vmatprep.subr.mxu0 0.0
        %769 = vmatpush1.msra.mxu0 0.0
        %770 = vmatprep.subr.mxu0 0.0
        %771 = vmatpush1.msra.mxu0 0.0
        %772 = vmatprep.subr.mxu0 0.0
        %773 = vmatpush1.msra.mxu0 0.0
        %774 = vmatprep.subr.mxu0 0.0
        %775 = vmatpush1.msra.mxu0 %v671
        %776 = vmatprep.subr.mxu0 0.0
        %777 = vmatpush2.msra.mxu0 0.0
        %778 = vmatprep.subr.mxu0 0.0
        %779 = vmatpush2.msra.mxu0 0.0
        %780 = vmatprep.subr.mxu0 0.0
        %781 = vmatpush2.msra.mxu0 0.0
        %782 = vmatprep.subr.mxu0 0.0
        %783 = vmatpush2.msra.mxu0 0.0
        %784 = vmatprep.subr.mxu0 0.0
        %785 = vmatpush2.msra.mxu0 0.0
        %786 = vmatprep.subr.mxu0 0.0
        %787 = vmatpush2.msra.mxu0 0.0
        %788 = vmatprep.subr.mxu0 0.0
        %789 = vmatpush2.msra.mxu0 0.0
        %790 = vmatprep.subr.mxu0 0.0
        %791 = vmatpush2.msra.mxu0 0.0
        %792 = vmatprep.subr.mxu0 0.0
        %793 = vmatpush2.msra.mxu0 0.0
        %794 = vmatprep.subr.mxu0 0.0
        %795 = vmatpush2.msra.mxu0 0.0
        %796 = vmatprep.subr.mxu0 0.0
        %797 = vmatpush2.msra.mxu0 0.0
        %798 = vmatprep.subr.mxu0 0.0
        %799 = vmatpush2.msra.mxu0 0.0
        %800 = vmatprep.subr.mxu0 0.0
        %801 = vmatpush2.msra.mxu0 0.0
        %802 = vmatprep.subr.mxu0 0.0
        %803 = vmatpush2.msra.mxu0 0.0
        %804 = vmatprep.subr.mxu0 0.0
        %805 = vmatpush2.msra.mxu0 0.0
        %806 = vmatprep.subr.mxu0 0.0
        %807 = vmatpush2.msra.mxu0 0.0
        %808 = vmatprep.mubr.f32.mxu0 0.0
        %809 = vmatmul.mubr.f32.gmra.mxu0 %v665
        %v810 = vpop.f32.mrf.mxu0
        %v811 = vadd.f32 0.0, %v810
        %v812 = vpop.f32.mrf.mxu0
        %813 = vdwg.mxu0
        %v814 = vadd.f32 %v650, %v740
        %v815 = vadd.f32 %v651, %v742
        %v816 = vadd.f32 %v652, %v811
        %s817 = scalar_lea.vmem %s1, 32
        %v818 = vld [vmem:[%s817] sm:$0xff]
        %819 = vrot.lane.b32.xlu0 %v170, 109
        %v820 = vpop.permute.xlu0 %819
        %821 = vrot.lane.b32.xlu0 %v177, 109
        %v822 = vpop.permute.xlu0 %821
        %823 = vrot.lane.b32.xlu0 %v171, 109
        %v824 = vpop.permute.xlu0 %823
        %vm825 = vcmask 891904
        %v826 = vsel %vm825, %v820, %v822
        %v827 = vsel %vm825, %v822, %v824
        %v829 = vsel %vm187, %v818, 0
        %v831 = vsel %vm191, %v826, 0
        %v833 = vsel %vm191, %v827, 0
        %v835 = vsel %vm191, %v824, 0
        %837 = vmatprep.subr.mxu0 0.0
        %838 = vmatpush1.msra.mxu0 0.0
        %839 = vmatprep.subr.mxu0 0.0
        %840 = vmatpush1.msra.mxu0 0.0
        %841 = vmatprep.subr.mxu0 0.0
        %842 = vmatpush1.msra.mxu0 0.0
        %843 = vmatprep.subr.mxu0 0.0
        %844 = vmatpush1.msra.mxu0 0.0
        %845 = vmatprep.subr.mxu0 0.0
        %846 = vmatpush1.msra.mxu0 0.0
        %847 = vmatprep.subr.mxu0 0.0
        %848 = vmatpush1.msra.mxu0 0.0
        %849 = vmatprep.subr.mxu0 0.0
        %850 = vmatpush1.msra.mxu0 0.0
        %851 = vmatprep.subr.mxu0 0.0
        %852 = vmatpush1.msra.mxu0 0.0
        %853 = vmatprep.subr.mxu0 0.0
        %854 = vmatpush1.msra.mxu0 0.0
        %855 = vmatprep.subr.mxu0 0.0
        %856 = vmatpush1.msra.mxu0 0.0
        %857 = vmatprep.subr.mxu0 0.0
        %858 = vmatpush1.msra.mxu0 0.0
        %859 = vmatprep.subr.mxu0 0.0
        %860 = vmatpush1.msra.mxu0 0.0
        %861 = vmatprep.subr.mxu0 0.0
        %862 = vmatpush1.msra.mxu0 0.0
        %863 = vmatprep.subr.mxu0 0.0
        %864 = vmatpush1.msra.mxu0 0.0
        %865 = vmatprep.subr.mxu0 0.0
        %866 = vmatpush1.msra.mxu0 0.0
        %867 = vmatprep.subr.mxu0 %v833
        %868 = vmatpush1.msra.mxu0 %v831
        %869 = vmatprep.subr.mxu0 0.0
        %870 = vmatpush2.msra.mxu0 0.0
        %871 = vmatprep.subr.mxu0 0.0
        %872 = vmatpush2.msra.mxu0 0.0
        %873 = vmatprep.subr.mxu0 0.0
        %874 = vmatpush2.msra.mxu0 0.0
        %875 = vmatprep.subr.mxu0 0.0
        %876 = vmatpush2.msra.mxu0 0.0
        %877 = vmatprep.subr.mxu0 0.0
        %878 = vmatpush2.msra.mxu0 0.0
        %879 = vmatprep.subr.mxu0 0.0
        %880 = vmatpush2.msra.mxu0 0.0
        %881 = vmatprep.subr.mxu0 0.0
        %882 = vmatpush2.msra.mxu0 0.0
        %883 = vmatprep.subr.mxu0 0.0
        %884 = vmatpush2.msra.mxu0 0.0
        %885 = vmatprep.subr.mxu0 0.0
        %886 = vmatpush2.msra.mxu0 0.0
        %887 = vmatprep.subr.mxu0 0.0
        %888 = vmatpush2.msra.mxu0 0.0
        %889 = vmatprep.subr.mxu0 0.0
        %890 = vmatpush2.msra.mxu0 0.0
        %891 = vmatprep.subr.mxu0 0.0
        %892 = vmatpush2.msra.mxu0 0.0
        %893 = vmatprep.subr.mxu0 0.0
        %894 = vmatpush2.msra.mxu0 0.0
        %895 = vmatprep.subr.mxu0 0.0
        %896 = vmatpush2.msra.mxu0 0.0
        %897 = vmatprep.subr.mxu0 0.0
        %898 = vmatpush2.msra.mxu0 0.0
        %899 = vmatprep.subr.mxu0 0.0
        %900 = vmatpush2.msra.mxu0 0.0
        %901 = vmatprep.mubr.f32.mxu0 0.0
        %902 = vmatmul.mubr.f32.gmra.mxu0 %v829
        %v903 = vpop.f32.mrf.mxu0
        %v904 = vadd.f32 0.0, %v903
        %v905 = vpop.f32.mrf.mxu0
        %v906 = vadd.f32 0.0, %v905
        %907 = vdwg.mxu0
        %908 = vmatprep.subr.mxu0 0.0
        %909 = vmatpush1.msra.mxu0 0.0
        %910 = vmatprep.subr.mxu0 0.0
        %911 = vmatpush1.msra.mxu0 0.0
        %912 = vmatprep.subr.mxu0 0.0
        %913 = vmatpush1.msra.mxu0 0.0
        %914 = vmatprep.subr.mxu0 0.0
        %915 = vmatpush1.msra.mxu0 0.0
        %916 = vmatprep.subr.mxu0 0.0
        %917 = vmatpush1.msra.mxu0 0.0
        %918 = vmatprep.subr.mxu0 0.0
        %919 = vmatpush1.msra.mxu0 0.0
        %920 = vmatprep.subr.mxu0 0.0
        %921 = vmatpush1.msra.mxu0 0.0
        %922 = vmatprep.subr.mxu0 0.0
        %923 = vmatpush1.msra.mxu0 0.0
        %924 = vmatprep.subr.mxu0 0.0
        %925 = vmatpush1.msra.mxu0 0.0
        %926 = vmatprep.subr.mxu0 0.0
        %927 = vmatpush1.msra.mxu0 0.0
        %928 = vmatprep.subr.mxu0 0.0
        %929 = vmatpush1.msra.mxu0 0.0
        %930 = vmatprep.subr.mxu0 0.0
        %931 = vmatpush1.msra.mxu0 0.0
        %932 = vmatprep.subr.mxu0 0.0
        %933 = vmatpush1.msra.mxu0 0.0
        %934 = vmatprep.subr.mxu0 0.0
        %935 = vmatpush1.msra.mxu0 0.0
        %936 = vmatprep.subr.mxu0 0.0
        %937 = vmatpush1.msra.mxu0 0.0
        %938 = vmatprep.subr.mxu0 0.0
        %939 = vmatpush1.msra.mxu0 %v835
        %940 = vmatprep.subr.mxu0 0.0
        %941 = vmatpush2.msra.mxu0 0.0
        %942 = vmatprep.subr.mxu0 0.0
        %943 = vmatpush2.msra.mxu0 0.0
        %944 = vmatprep.subr.mxu0 0.0
        %945 = vmatpush2.msra.mxu0 0.0
        %946 = vmatprep.subr.mxu0 0.0
        %947 = vmatpush2.msra.mxu0 0.0
        %948 = vmatprep.subr.mxu0 0.0
        %949 = vmatpush2.msra.mxu0 0.0
        %950 = vmatprep.subr.mxu0 0.0
        %951 = vmatpush2.msra.mxu0 0.0
        %952 = vmatprep.subr.mxu0 0.0
        %953 = vmatpush2.msra.mxu0 0.0
        %954 = vmatprep.subr.mxu0 0.0
        %955 = vmatpush2.msra.mxu0 0.0
        %956 = vmatprep.subr.mxu0 0.0
        %957 = vmatpush2.msra.mxu0 0.0
        %958 = vmatprep.subr.mxu0 0.0
        %959 = vmatpush2.msra.mxu0 0.0
        %960 = vmatprep.subr.mxu0 0.0
        %961 = vmatpush2.msra.mxu0 0.0
        %962 = vmatprep.subr.mxu0 0.0
        %963 = vmatpush2.msra.mxu0 0.0
        %964 = vmatprep.subr.mxu0 0.0
        %965 = vmatpush2.msra.mxu0 0.0
        %966 = vmatprep.subr.mxu0 0.0
        %967 = vmatpush2.msra.mxu0 0.0
        %968 = vmatprep.subr.mxu0 0.0
        %969 = vmatpush2.msra.mxu0 0.0
        %970 = vmatprep.subr.mxu0 0.0
        %971 = vmatpush2.msra.mxu0 0.0
        %972 = vmatprep.mubr.f32.mxu0 0.0
        %973 = vmatmul.mubr.f32.gmra.mxu0 %v829
        %v974 = vpop.f32.mrf.mxu0
        %v975 = vadd.f32 0.0, %v974
        %v976 = vpop.f32.mrf.mxu0
        %977 = vdwg.mxu0
        %v978 = vadd.f32 %v814, %v904
        %v979 = vadd.f32 %v815, %v906
        %v980 = vadd.f32 %v816, %v975
        %s981 = scalar_lea.vmem %s1, 40
        %v982 = vld [vmem:[%s981] sm:$0xff]
        %983 = vrot.lane.b32.xlu0 %v170, 108
        %v984 = vpop.permute.xlu0 %983
        %985 = vrot.lane.b32.xlu0 %v177, 108
        %v986 = vpop.permute.xlu0 %985
        %987 = vrot.lane.b32.xlu0 %v171, 108
        %v988 = vpop.permute.xlu0 %987
        %vm989 = vcmask 883712
        %v990 = vsel %vm989, %v984, %v986
        %v991 = vsel %vm989, %v986, %v988
        %v993 = vsel %vm187, %v982, 0
        %v995 = vsel %vm191, %v990, 0
        %v997 = vsel %vm191, %v991, 0
        %v999 = vsel %vm191, %v988, 0
        %1001 = vmatprep.subr.mxu0 0.0
        %1002 = vmatpush1.msra.mxu0 0.0
        %1003 = vmatprep.subr.mxu0 0.0
        %1004 = vmatpush1.msra.mxu0 0.0
        %1005 = vmatprep.subr.mxu0 0.0
        %1006 = vmatpush1.msra.mxu0 0.0
        %1007 = vmatprep.subr.mxu0 0.0
        %1008 = vmatpush1.msra.mxu0 0.0
        %1009 = vmatprep.subr.mxu0 0.0
        %1010 = vmatpush1.msra.mxu0 0.0
        %1011 = vmatprep.subr.mxu0 0.0
        %1012 = vmatpush1.msra.mxu0 0.0
        %1013 = vmatprep.subr.mxu0 0.0
        %1014 = vmatpush1.msra.mxu0 0.0
        %1015 = vmatprep.subr.mxu0 0.0
        %1016 = vmatpush1.msra.mxu0 0.0
        %1017 = vmatprep.subr.mxu0 0.0
        %1018 = vmatpush1.msra.mxu0 0.0
        %1019 = vmatprep.subr.mxu0 0.0
        %1020 = vmatpush1.msra.mxu0 0.0
        %1021 = vmatprep.subr.mxu0 0.0
        %1022 = vmatpush1.msra.mxu0 0.0
        %1023 = vmatprep.subr.mxu0 0.0
        %1024 = vmatpush1.msra.mxu0 0.0
        %1025 = vmatprep.subr.mxu0 0.0
        %1026 = vmatpush1.msra.mxu0 0.0
        %1027 = vmatprep.subr.mxu0 0.0
        %1028 = vmatpush1.msra.mxu0 0.0
        %1029 = vmatprep.subr.mxu0 0.0
        %1030 = vmatpush1.msra.mxu0 0.0
        %1031 = vmatprep.subr.mxu0 %v997
        %1032 = vmatpush1.msra.mxu0 %v995
        %1033 = vmatprep.subr.mxu0 0.0
        %1034 = vmatpush2.msra.mxu0 0.0
        %1035 = vmatprep.subr.mxu0 0.0
        %1036 = vmatpush2.msra.mxu0 0.0
        %1037 = vmatprep.subr.mxu0 0.0
        %1038 = vmatpush2.msra.mxu0 0.0
        %1039 = vmatprep.subr.mxu0 0.0
        %1040 = vmatpush2.msra.mxu0 0.0
        %1041 = vmatprep.subr.mxu0 0.0
        %1042 = vmatpush2.msra.mxu0 0.0
        %1043 = vmatprep.subr.mxu0 0.0
        %1044 = vmatpush2.msra.mxu0 0.0
        %1045 = vmatprep.subr.mxu0 0.0
        %1046 = vmatpush2.msra.mxu0 0.0
        %1047 = vmatprep.subr.mxu0 0.0
        %1048 = vmatpush2.msra.mxu0 0.0
        %1049 = vmatprep.subr.mxu0 0.0
        %1050 = vmatpush2.msra.mxu0 0.0
        %1051 = vmatprep.subr.mxu0 0.0
        %1052 = vmatpush2.msra.mxu0 0.0
        %1053 = vmatprep.subr.mxu0 0.0
        %1054 = vmatpush2.msra.mxu0 0.0
        %1055 = vmatprep.subr.mxu0 0.0
        %1056 = vmatpush2.msra.mxu0 0.0
        %1057 = vmatprep.subr.mxu0 0.0
        %1058 = vmatpush2.msra.mxu0 0.0
        %1059 = vmatprep.subr.mxu0 0.0
        %1060 = vmatpush2.msra.mxu0 0.0
        %1061 = vmatprep.subr.mxu0 0.0
        %1062 = vmatpush2.msra.mxu0 0.0
        %1063 = vmatprep.subr.mxu0 0.0
        %1064 = vmatpush2.msra.mxu0 0.0
        %1065 = vmatprep.mubr.f32.mxu0 0.0
        %1066 = vmatmul.mubr.f32.gmra.mxu0 %v993
        %v1067 = vpop.f32.mrf.mxu0
        %v1068 = vadd.f32 0.0, %v1067
        %v1069 = vpop.f32.mrf.mxu0
        %v1070 = vadd.f32 0.0, %v1069
        %1071 = vdwg.mxu0
        %1072 = vmatprep.subr.mxu0 0.0
        %1073 = vmatpush1.msra.mxu0 0.0
        %1074 = vmatprep.subr.mxu0 0.0
        %1075 = vmatpush1.msra.mxu0 0.0
        %1076 = vmatprep.subr.mxu0 0.0
        %1077 = vmatpush1.msra.mxu0 0.0
        %1078 = vmatprep.subr.mxu0 0.0
        %1079 = vmatpush1.msra.mxu0 0.0
        %1080 = vmatprep.subr.mxu0 0.0
        %1081 = vmatpush1.msra.mxu0 0.0
        %1082 = vmatprep.subr.mxu0 0.0
        %1083 = vmatpush1.msra.mxu0 0.0
        %1084 = vmatprep.subr.mxu0 0.0
        %1085 = vmatpush1.msra.mxu0 0.0
        %1086 = vmatprep.subr.mxu0 0.0
        %1087 = vmatpush1.msra.mxu0 0.0
        %1088 = vmatprep.subr.mxu0 0.0
        %1089 = vmatpush1.msra.mxu0 0.0
        %1090 = vmatprep.subr.mxu0 0.0
        %1091 = vmatpush1.msra.mxu0 0.0
        %1092 = vmatprep.subr.mxu0 0.0
        %1093 = vmatpush1.msra.mxu0 0.0
        %1094 = vmatprep.subr.mxu0 0.0
        %1095 = vmatpush1.msra.mxu0 0.0
        %1096 = vmatprep.subr.mxu0 0.0
        %1097 = vmatpush1.msra.mxu0 0.0
        %1098 = vmatprep.subr.mxu0 0.0
        %1099 = vmatpush1.msra.mxu0 0.0
        %1100 = vmatprep.subr.mxu0 0.0
        %1101 = vmatpush1.msra.mxu0 0.0
        %1102 = vmatprep.subr.mxu0 0.0
        %1103 = vmatpush1.msra.mxu0 %v999
        %1104 = vmatprep.subr.mxu0 0.0
        %1105 = vmatpush2.msra.mxu0 0.0
        %1106 = vmatprep.subr.mxu0 0.0
        %1107 = vmatpush2.msra.mxu0 0.0
        %1108 = vmatprep.subr.mxu0 0.0
        %1109 = vmatpush2.msra.mxu0 0.0
        %1110 = vmatprep.subr.mxu0 0.0
        %1111 = vmatpush2.msra.mxu0 0.0
        %1112 = vmatprep.subr.mxu0 0.0
        %1113 = vmatpush2.msra.mxu0 0.0
        %1114 = vmatprep.subr.mxu0 0.0
        %1115 = vmatpush2.msra.mxu0 0.0
        %1116 = vmatprep.subr.mxu0 0.0
        %1117 = vmatpush2.msra.mxu0 0.0
        %1118 = vmatprep.subr.mxu0 0.0
        %1119 = vmatpush2.msra.mxu0 0.0
        %1120 = vmatprep.subr.mxu0 0.0
        %1121 = vmatpush2.msra.mxu0 0.0
        %1122 = vmatprep.subr.mxu0 0.0
        %1123 = vmatpush2.msra.mxu0 0.0
        %1124 = vmatprep.subr.mxu0 0.0
        %1125 = vmatpush2.msra.mxu0 0.0
        %1126 = vmatprep.subr.mxu0 0.0
        %1127 = vmatpush2.msra.mxu0 0.0
        %1128 = vmatprep.subr.mxu0 0.0
        %1129 = vmatpush2.msra.mxu0 0.0
        %1130 = vmatprep.subr.mxu0 0.0
        %1131 = vmatpush2.msra.mxu0 0.0
        %1132 = vmatprep.subr.mxu0 0.0
        %1133 = vmatpush2.msra.mxu0 0.0
        %1134 = vmatprep.subr.mxu0 0.0
        %1135 = vmatpush2.msra.mxu0 0.0
        %1136 = vmatprep.mubr.f32.mxu0 0.0
        %1137 = vmatmul.mubr.f32.gmra.mxu0 %v993
        %v1138 = vpop.f32.mrf.mxu0
        %v1139 = vadd.f32 0.0, %v1138
        %v1140 = vpop.f32.mrf.mxu0
        %1141 = vdwg.mxu0
        %v1142 = vadd.f32 %v978, %v1068
        %v1143 = vadd.f32 %v979, %v1070
        %v1144 = vadd.f32 %v980, %v1139
        %s1145 = scalar_lea.vmem %s1, 48
        %v1146 = vld [vmem:[%s1145] sm:$0xff]
        %1147 = vrot.lane.b32.xlu0 %v170, 92
        %v1148 = vpop.permute.xlu0 %1147
        %1149 = vrot.lane.b32.xlu0 %v177, 92
        %v1150 = vpop.permute.xlu0 %1149
        %1151 = vrot.lane.b32.xlu0 %v171, 92
        %v1152 = vpop.permute.xlu0 %1151
        %vm1153 = vcmask 752640
        %v1154 = vsel %vm1153, %v1148, %v1150
        %v1155 = vsel %vm1153, %v1150, %v1152
        %v1157 = vsel %vm187, %v1146, 0
        %v1159 = vsel %vm191, %v1154, 0
        %v1161 = vsel %vm191, %v1155, 0
        %v1163 = vsel %vm191, %v1152, 0
        %1165 = vmatprep.subr.mxu0 0.0
        %1166 = vmatpush1.msra.mxu0 0.0
        %1167 = vmatprep.subr.mxu0 0.0
        %1168 = vmatpush1.msra.mxu0 0.0
        %1169 = vmatprep.subr.mxu0 0.0
        %1170 = vmatpush1.msra.mxu0 0.0
        %1171 = vmatprep.subr.mxu0 0.0
        %1172 = vmatpush1.msra.mxu0 0.0
        %1173 = vmatprep.subr.mxu0 0.0
        %1174 = vmatpush1.msra.mxu0 0.0
        %1175 = vmatprep.subr.mxu0 0.0
        %1176 = vmatpush1.msra.mxu0 0.0
        %1177 = vmatprep.subr.mxu0 0.0
        %1178 = vmatpush1.msra.mxu0 0.0
        %1179 = vmatprep.subr.mxu0 0.0
        %1180 = vmatpush1.msra.mxu0 0.0
        %1181 = vmatprep.subr.mxu0 0.0
        %1182 = vmatpush1.msra.mxu0 0.0
        %1183 = vmatprep.subr.mxu0 0.0
        %1184 = vmatpush1.msra.mxu0 0.0
        %1185 = vmatprep.subr.mxu0 0.0
        %1186 = vmatpush1.msra.mxu0 0.0
        %1187 = vmatprep.subr.mxu0 0.0
        %1188 = vmatpush1.msra.mxu0 0.0
        %1189 = vmatprep.subr.mxu0 0.0
        %1190 = vmatpush1.msra.mxu0 0.0
        %1191 = vmatprep.subr.mxu0 0.0
        %1192 = vmatpush1.msra.mxu0 0.0
        %1193 = vmatprep.subr.mxu0 0.0
        %1194 = vmatpush1.msra.mxu0 0.0
        %1195 = vmatprep.subr.mxu0 %v1161
        %1196 = vmatpush1.msra.mxu0 %v1159
        %1197 = vmatprep.subr.mxu0 0.0
        %1198 = vmatpush2.msra.mxu0 0.0
        %1199 = vmatprep.subr.mxu0 0.0
        %1200 = vmatpush2.msra.mxu0 0.0
        %1201 = vmatprep.subr.mxu0 0.0
        %1202 = vmatpush2.msra.mxu0 0.0
        %1203 = vmatprep.subr.mxu0 0.0
        %1204 = vmatpush2.msra.mxu0 0.0
        %1205 = vmatprep.subr.mxu0 0.0
        %1206 = vmatpush2.msra.mxu0 0.0
        %1207 = vmatprep.subr.mxu0 0.0
        %1208 = vmatpush2.msra.mxu0 0.0
        %1209 = vmatprep.subr.mxu0 0.0
        %1210 = vmatpush2.msra.mxu0 0.0
        %1211 = vmatprep.subr.mxu0 0.0
        %1212 = vmatpush2.msra.mxu0 0.0
        %1213 = vmatprep.subr.mxu0 0.0
        %1214 = vmatpush2.msra.mxu0 0.0
        %1215 = vmatprep.subr.mxu0 0.0
        %1216 = vmatpush2.msra.mxu0 0.0
        %1217 = vmatprep.subr.mxu0 0.0
        %1218 = vmatpush2.msra.mxu0 0.0
        %1219 = vmatprep.subr.mxu0 0.0
        %1220 = vmatpush2.msra.mxu0 0.0
        %1221 = vmatprep.subr.mxu0 0.0
        %1222 = vmatpush2.msra.mxu0 0.0
        %1223 = vmatprep.subr.mxu0 0.0
        %1224 = vmatpush2.msra.mxu0 0.0
        %1225 = vmatprep.subr.mxu0 0.0
        %1226 = vmatpush2.msra.mxu0 0.0
        %1227 = vmatprep.subr.mxu0 0.0
        %1228 = vmatpush2.msra.mxu0 0.0
        %1229 = vmatprep.mubr.f32.mxu0 0.0
        %1230 = vmatmul.mubr.f32.gmra.mxu0 %v1157
        %v1231 = vpop.f32.mrf.mxu0
        %v1232 = vadd.f32 0.0, %v1231
        %v1233 = vpop.f32.mrf.mxu0
        %v1234 = vadd.f32 0.0, %v1233
        %1235 = vdwg.mxu0
        %1236 = vmatprep.subr.mxu0 0.0
        %1237 = vmatpush1.msra.mxu0 0.0
        %1238 = vmatprep.subr.mxu0 0.0
        %1239 = vmatpush1.msra.mxu0 0.0
        %1240 = vmatprep.subr.mxu0 0.0
        %1241 = vmatpush1.msra.mxu0 0.0
        %1242 = vmatprep.subr.mxu0 0.0
        %1243 = vmatpush1.msra.mxu0 0.0
        %1244 = vmatprep.subr.mxu0 0.0
        %1245 = vmatpush1.msra.mxu0 0.0
        %1246 = vmatprep.subr.mxu0 0.0
        %1247 = vmatpush1.msra.mxu0 0.0
        %1248 = vmatprep.subr.mxu0 0.0
        %1249 = vmatpush1.msra.mxu0 0.0
        %1250 = vmatprep.subr.mxu0 0.0
        %1251 = vmatpush1.msra.mxu0 0.0
        %1252 = vmatprep.subr.mxu0 0.0
        %1253 = vmatpush1.msra.mxu0 0.0
        %1254 = vmatprep.subr.mxu0 0.0
        %1255 = vmatpush1.msra.mxu0 0.0
        %1256 = vmatprep.subr.mxu0 0.0
        %1257 = vmatpush1.msra.mxu0 0.0
        %1258 = vmatprep.subr.mxu0 0.0
        %1259 = vmatpush1.msra.mxu0 0.0
        %1260 = vmatprep.subr.mxu0 0.0
        %1261 = vmatpush1.msra.mxu0 0.0
        %1262 = vmatprep.subr.mxu0 0.0
        %1263 = vmatpush1.msra.mxu0 0.0
        %1264 = vmatprep.subr.mxu0 0.0
        %1265 = vmatpush1.msra.mxu0 0.0
        %1266 = vmatprep.subr.mxu0 0.0
        %1267 = vmatpush1.msra.mxu0 %v1163
        %1268 = vmatprep.subr.mxu0 0.0
        %1269 = vmatpush2.msra.mxu0 0.0
        %1270 = vmatprep.subr.mxu0 0.0
        %1271 = vmatpush2.msra.mxu0 0.0
        %1272 = vmatprep.subr.mxu0 0.0
        %1273 = vmatpush2.msra.mxu0 0.0
        %1274 = vmatprep.subr.mxu0 0.0
        %1275 = vmatpush2.msra.mxu0 0.0
        %1276 = vmatprep.subr.mxu0 0.0
        %1277 = vmatpush2.msra.mxu0 0.0
        %1278 = vmatprep.subr.mxu0 0.0
        %1279 = vmatpush2.msra.mxu0 0.0
        %1280 = vmatprep.subr.mxu0 0.0
        %1281 = vmatpush2.msra.mxu0 0.0
        %1282 = vmatprep.subr.mxu0 0.0
        %1283 = vmatpush2.msra.mxu0 0.0
        %1284 = vmatprep.subr.mxu0 0.0
        %1285 = vmatpush2.msra.mxu0 0.0
        %1286 = vmatprep.subr.mxu0 0.0
        %1287 = vmatpush2.msra.mxu0 0.0
        %1288 = vmatprep.subr.mxu0 0.0
        %1289 = vmatpush2.msra.mxu0 0.0
        %1290 = vmatprep.subr.mxu0 0.0
        %1291 = vmatpush2.msra.mxu0 0.0
        %1292 = vmatprep.subr.mxu0 0.0
        %1293 = vmatpush2.msra.mxu0 0.0
        %1294 = vmatprep.subr.mxu0 0.0
        %1295 = vmatpush2.msra.mxu0 0.0
        %1296 = vmatprep.subr.mxu0 0.0
        %1297 = vmatpush2.msra.mxu0 0.0
        %1298 = vmatprep.subr.mxu0 0.0
        %1299 = vmatpush2.msra.mxu0 0.0
        %1300 = vmatprep.mubr.f32.mxu0 0.0
        %1301 = vmatmul.mubr.f32.gmra.mxu0 %v1157
        %v1302 = vpop.f32.mrf.mxu0
        %v1303 = vadd.f32 0.0, %v1302
        %v1304 = vpop.f32.mrf.mxu0
        %1305 = vdwg.mxu0
        %v1306 = vadd.f32 %v1142, %v1232
        %v1307 = vadd.f32 %v1143, %v1234
        %v1308 = vadd.f32 %v1144, %v1303
        %s1309 = scalar_lea.vmem %s1, 56
        %v1310 = vld [vmem:[%s1309] sm:$0xff]
        %1311 = vrot.lane.b32.xlu0 %v170, 91
        %v1312 = vpop.permute.xlu0 %1311
        %1313 = vrot.lane.b32.xlu0 %v177, 91
        %v1314 = vpop.permute.xlu0 %1313
        %1315 = vrot.lane.b32.xlu0 %v171, 91
        %v1316 = vpop.permute.xlu0 %1315
        %vm1317 = vcmask 744448
        %v1318 = vsel %vm1317, %v1312, %v1314
        %v1319 = vsel %vm1317, %v1314, %v1316
        %v1321 = vsel %vm187, %v1310, 0
        %v1323 = vsel %vm191, %v1318, 0
        %v1325 = vsel %vm191, %v1319, 0
        %v1327 = vsel %vm191, %v1316, 0
        %1329 = vmatprep.subr.mxu0 0.0
        %1330 = vmatpush1.msra.mxu0 0.0
        %1331 = vmatprep.subr.mxu0 0.0
        %1332 = vmatpush1.msra.mxu0 0.0
        %1333 = vmatprep.subr.mxu0 0.0
        %1334 = vmatpush1.msra.mxu0 0.0
        %1335 = vmatprep.subr.mxu0 0.0
        %1336 = vmatpush1.msra.mxu0 0.0
        %1337 = vmatprep.subr.mxu0 0.0
        %1338 = vmatpush1.msra.mxu0 0.0
        %1339 = vmatprep.subr.mxu0 0.0
        %1340 = vmatpush1.msra.mxu0 0.0
        %1341 = vmatprep.subr.mxu0 0.0
        %1342 = vmatpush1.msra.mxu0 0.0
        %1343 = vmatprep.subr.mxu0 0.0
        %1344 = vmatpush1.msra.mxu0 0.0
        %1345 = vmatprep.subr.mxu0 0.0
        %1346 = vmatpush1.msra.mxu0 0.0
        %1347 = vmatprep.subr.mxu0 0.0
        %1348 = vmatpush1.msra.mxu0 0.0
        %1349 = vmatprep.subr.mxu0 0.0
        %1350 = vmatpush1.msra.mxu0 0.0
        %1351 = vmatprep.subr.mxu0 0.0
        %1352 = vmatpush1.msra.mxu0 0.0
        %1353 = vmatprep.subr.mxu0 0.0
        %1354 = vmatpush1.msra.mxu0 0.0
        %1355 = vmatprep.subr.mxu0 0.0
        %1356 = vmatpush1.msra.mxu0 0.0
        %1357 = vmatprep.subr.mxu0 0.0
        %1358 = vmatpush1.msra.mxu0 0.0
        %1359 = vmatprep.subr.mxu0 %v1325
        %1360 = vmatpush1.msra.mxu0 %v1323
        %1361 = vmatprep.subr.mxu0 0.0
        %1362 = vmatpush2.msra.mxu0 0.0
        %1363 = vmatprep.subr.mxu0 0.0
        %1364 = vmatpush2.msra.mxu0 0.0
        %1365 = vmatprep.subr.mxu0 0.0
        %1366 = vmatpush2.msra.mxu0 0.0
        %1367 = vmatprep.subr.mxu0 0.0
        %1368 = vmatpush2.msra.mxu0 0.0
        %1369 = vmatprep.subr.mxu0 0.0
        %1370 = vmatpush2.msra.mxu0 0.0
        %1371 = vmatprep.subr.mxu0 0.0
        %1372 = vmatpush2.msra.mxu0 0.0
        %1373 = vmatprep.subr.mxu0 0.0
        %1374 = vmatpush2.msra.mxu0 0.0
        %1375 = vmatprep.subr.mxu0 0.0
        %1376 = vmatpush2.msra.mxu0 0.0
        %1377 = vmatprep.subr.mxu0 0.0
        %1378 = vmatpush2.msra.mxu0 0.0
        %1379 = vmatprep.subr.mxu0 0.0
        %1380 = vmatpush2.msra.mxu0 0.0
        %1381 = vmatprep.subr.mxu0 0.0
        %1382 = vmatpush2.msra.mxu0 0.0
        %1383 = vmatprep.subr.mxu0 0.0
        %1384 = vmatpush2.msra.mxu0 0.0
        %1385 = vmatprep.subr.mxu0 0.0
        %1386 = vmatpush2.msra.mxu0 0.0
        %1387 = vmatprep.subr.mxu0 0.0
        %1388 = vmatpush2.msra.mxu0 0.0
        %1389 = vmatprep.subr.mxu0 0.0
        %1390 = vmatpush2.msra.mxu0 0.0
        %1391 = vmatprep.subr.mxu0 0.0
        %1392 = vmatpush2.msra.mxu0 0.0
        %1393 = vmatprep.mubr.f32.mxu0 0.0
        %1394 = vmatmul.mubr.f32.gmra.mxu0 %v1321
        %v1395 = vpop.f32.mrf.mxu0
        %v1396 = vadd.f32 0.0, %v1395
        %v1397 = vpop.f32.mrf.mxu0
        %v1398 = vadd.f32 0.0, %v1397
        %1399 = vdwg.mxu0
        %1400 = vmatprep.subr.mxu0 0.0
        %1401 = vmatpush1.msra.mxu0 0.0
        %1402 = vmatprep.subr.mxu0 0.0
        %1403 = vmatpush1.msra.mxu0 0.0
        %1404 = vmatprep.subr.mxu0 0.0
        %1405 = vmatpush1.msra.mxu0 0.0
        %1406 = vmatprep.subr.mxu0 0.0
        %1407 = vmatpush1.msra.mxu0 0.0
        %1408 = vmatprep.subr.mxu0 0.0
        %1409 = vmatpush1.msra.mxu0 0.0
        %1410 = vmatprep.subr.mxu0 0.0
        %1411 = vmatpush1.msra.mxu0 0.0
        %1412 = vmatprep.subr.mxu0 0.0
        %1413 = vmatpush1.msra.mxu0 0.0
        %1414 = vmatprep.subr.mxu0 0.0
        %1415 = vmatpush1.msra.mxu0 0.0
        %1416 = vmatprep.subr.mxu0 0.0
        %1417 = vmatpush1.msra.mxu0 0.0
        %1418 = vmatprep.subr.mxu0 0.0
        %1419 = vmatpush1.msra.mxu0 0.0
        %1420 = vmatprep.subr.mxu0 0.0
        %1421 = vmatpush1.msra.mxu0 0.0
        %1422 = vmatprep.subr.mxu0 0.0
        %1423 = vmatpush1.msra.mxu0 0.0
        %1424 = vmatprep.subr.mxu0 0.0
        %1425 = vmatpush1.msra.mxu0 0.0
        %1426 = vmatprep.subr.mxu0 0.0
        %1427 = vmatpush1.msra.mxu0 0.0
        %1428 = vmatprep.subr.mxu0 0.0
        %1429 = vmatpush1.msra.mxu0 0.0
        %1430 = vmatprep.subr.mxu0 0.0
        %1431 = vmatpush1.msra.mxu0 %v1327
        %1432 = vmatprep.subr.mxu0 0.0
        %1433 = vmatpush2.msra.mxu0 0.0
        %1434 = vmatprep.subr.mxu0 0.0
        %1435 = vmatpush2.msra.mxu0 0.0
        %1436 = vmatprep.subr.mxu0 0.0
        %1437 = vmatpush2.msra.mxu0 0.0
        %1438 = vmatprep.subr.mxu0 0.0
        %1439 = vmatpush2.msra.mxu0 0.0
        %1440 = vmatprep.subr.mxu0 0.0
        %1441 = vmatpush2.msra.mxu0 0.0
        %1442 = vmatprep.subr.mxu0 0.0
        %1443 = vmatpush2.msra.mxu0 0.0
        %1444 = vmatprep.subr.mxu0 0.0
        %1445 = vmatpush2.msra.mxu0 0.0
        %1446 = vmatprep.subr.mxu0 0.0
        %1447 = vmatpush2.msra.mxu0 0.0
        %1448 = vmatprep.subr.mxu0 0.0
        %1449 = vmatpush2.msra.mxu0 0.0
        %1450 = vmatprep.subr.mxu0 0.0
        %1451 = vmatpush2.msra.mxu0 0.0
        %1452 = vmatprep.subr.mxu0 0.0
        %1453 = vmatpush2.msra.mxu0 0.0
        %1454 = vmatprep.subr.mxu0 0.0
        %1455 = vmatpush2.msra.mxu0 0.0
        %1456 = vmatprep.subr.mxu0 0.0
        %1457 = vmatpush2.msra.mxu0 0.0
        %1458 = vmatprep.subr.mxu0 0.0
        %1459 = vmatpush2.msra.mxu0 0.0
        %1460 = vmatprep.subr.mxu0 0.0
        %1461 = vmatpush2.msra.mxu0 0.0
        %1462 = vmatprep.subr.mxu0 0.0
        %1463 = vmatpush2.msra.mxu0 0.0
        %1464 = vmatprep.mubr.f32.mxu0 0.0
        %1465 = vmatmul.mubr.f32.gmra.mxu0 %v1321
        %v1466 = vpop.f32.mrf.mxu0
        %v1467 = vadd.f32 0.0, %v1466
        %v1468 = vpop.f32.mrf.mxu0
        %1469 = vdwg.mxu0
        %v1470 = vadd.f32 %v1306, %v1396
        %v1471 = vadd.f32 %v1307, %v1398
        %v1472 = vadd.f32 %v1308, %v1467
        %s1473 = scalar_lea.vmem %s1, 64
        %v1474 = vld [vmem:[%s1473] sm:$0xff]
        %1475 = vrot.lane.b32.xlu0 %v170, 90
        %v1476 = vpop.permute.xlu0 %1475
        %1477 = vrot.lane.b32.xlu0 %v177, 90
        %v1478 = vpop.permute.xlu0 %1477
        %1479 = vrot.lane.b32.xlu0 %v171, 90
        %v1480 = vpop.permute.xlu0 %1479
        %vm1481 = vcmask 736256
        %v1482 = vsel %vm1481, %v1476, %v1478
        %v1483 = vsel %vm1481, %v1478, %v1480
        %v1485 = vsel %vm187, %v1474, 0
        %v1487 = vsel %vm191, %v1482, 0
        %v1489 = vsel %vm191, %v1483, 0
        %v1491 = vsel %vm191, %v1480, 0
        %1493 = vmatprep.subr.mxu0 0.0
        %1494 = vmatpush1.msra.mxu0 0.0
        %1495 = vmatprep.subr.mxu0 0.0
        %1496 = vmatpush1.msra.mxu0 0.0
        %1497 = vmatprep.subr.mxu0 0.0
        %1498 = vmatpush1.msra.mxu0 0.0
        %1499 = vmatprep.subr.mxu0 0.0
        %1500 = vmatpush1.msra.mxu0 0.0
        %1501 = vmatprep.subr.mxu0 0.0
        %1502 = vmatpush1.msra.mxu0 0.0
        %1503 = vmatprep.subr.mxu0 0.0
        %1504 = vmatpush1.msra.mxu0 0.0
        %1505 = vmatprep.subr.mxu0 0.0
        %1506 = vmatpush1.msra.mxu0 0.0
        %1507 = vmatprep.subr.mxu0 0.0
        %1508 = vmatpush1.msra.mxu0 0.0
        %1509 = vmatprep.subr.mxu0 0.0
        %1510 = vmatpush1.msra.mxu0 0.0
        %1511 = vmatprep.subr.mxu0 0.0
        %1512 = vmatpush1.msra.mxu0 0.0
        %1513 = vmatprep.subr.mxu0 0.0
        %1514 = vmatpush1.msra.mxu0 0.0
        %1515 = vmatprep.subr.mxu0 0.0
        %1516 = vmatpush1.msra.mxu0 0.0
        %1517 = vmatprep.subr.mxu0 0.0
        %1518 = vmatpush1.msra.mxu0 0.0
        %1519 = vmatprep.subr.mxu0 0.0
        %1520 = vmatpush1.msra.mxu0 0.0
        %1521 = vmatprep.subr.mxu0 0.0
        %1522 = vmatpush1.msra.mxu0 0.0
        %1523 = vmatprep.subr.mxu0 %v1489
        %1524 = vmatpush1.msra.mxu0 %v1487
        %1525 = vmatprep.subr.mxu0 0.0
        %1526 = vmatpush2.msra.mxu0 0.0
        %1527 = vmatprep.subr.mxu0 0.0
        %1528 = vmatpush2.msra.mxu0 0.0
        %1529 = vmatprep.subr.mxu0 0.0
        %1530 = vmatpush2.msra.mxu0 0.0
        %1531 = vmatprep.subr.mxu0 0.0
        %1532 = vmatpush2.msra.mxu0 0.0
        %1533 = vmatprep.subr.mxu0 0.0
        %1534 = vmatpush2.msra.mxu0 0.0
        %1535 = vmatprep.subr.mxu0 0.0
        %1536 = vmatpush2.msra.mxu0 0.0
        %1537 = vmatprep.subr.mxu0 0.0
        %1538 = vmatpush2.msra.mxu0 0.0
        %1539 = vmatprep.subr.mxu0 0.0
        %1540 = vmatpush2.msra.mxu0 0.0
        %1541 = vmatprep.subr.mxu0 0.0
        %1542 = vmatpush2.msra.mxu0 0.0
        %1543 = vmatprep.subr.mxu0 0.0
        %1544 = vmatpush2.msra.mxu0 0.0
        %1545 = vmatprep.subr.mxu0 0.0
        %1546 = vmatpush2.msra.mxu0 0.0
        %1547 = vmatprep.subr.mxu0 0.0
        %1548 = vmatpush2.msra.mxu0 0.0
        %1549 = vmatprep.subr.mxu0 0.0
        %1550 = vmatpush2.msra.mxu0 0.0
        %1551 = vmatprep.subr.mxu0 0.0
        %1552 = vmatpush2.msra.mxu0 0.0
        %1553 = vmatprep.subr.mxu0 0.0
        %1554 = vmatpush2.msra.mxu0 0.0
        %1555 = vmatprep.subr.mxu0 0.0
        %1556 = vmatpush2.msra.mxu0 0.0
        %1557 = vmatprep.mubr.f32.mxu0 0.0
        %1558 = vmatmul.mubr.f32.gmra.mxu0 %v1485
        %v1559 = vpop.f32.mrf.mxu0
        %v1560 = vadd.f32 0.0, %v1559
        %v1561 = vpop.f32.mrf.mxu0
        %v1562 = vadd.f32 0.0, %v1561
        %1563 = vdwg.mxu0
        %1564 = vmatprep.subr.mxu0 0.0
        %1565 = vmatpush1.msra.mxu0 0.0
        %1566 = vmatprep.subr.mxu0 0.0
        %1567 = vmatpush1.msra.mxu0 0.0
        %1568 = vmatprep.subr.mxu0 0.0
        %1569 = vmatpush1.msra.mxu0 0.0
        %1570 = vmatprep.subr.mxu0 0.0
        %1571 = vmatpush1.msra.mxu0 0.0
        %1572 = vmatprep.subr.mxu0 0.0
        %1573 = vmatpush1.msra.mxu0 0.0
        %1574 = vmatprep.subr.mxu0 0.0
        %1575 = vmatpush1.msra.mxu0 0.0
        %1576 = vmatprep.subr.mxu0 0.0
        %1577 = vmatpush1.msra.mxu0 0.0
        %1578 = vmatprep.subr.mxu0 0.0
        %1579 = vmatpush1.msra.mxu0 0.0
        %1580 = vmatprep.subr.mxu0 0.0
        %1581 = vmatpush1.msra.mxu0 0.0
        %1582 = vmatprep.subr.mxu0 0.0
        %1583 = vmatpush1.msra.mxu0 0.0
        %1584 = vmatprep.subr.mxu0 0.0
        %1585 = vmatpush1.msra.mxu0 0.0
        %1586 = vmatprep.subr.mxu0 0.0
        %1587 = vmatpush1.msra.mxu0 0.0
        %1588 = vmatprep.subr.mxu0 0.0
        %1589 = vmatpush1.msra.mxu0 0.0
        %1590 = vmatprep.subr.mxu0 0.0
        %1591 = vmatpush1.msra.mxu0 0.0
        %1592 = vmatprep.subr.mxu0 0.0
        %1593 = vmatpush1.msra.mxu0 0.0
        %1594 = vmatprep.subr.mxu0 0.0
        %1595 = vmatpush1.msra.mxu0 %v1491
        %1596 = vmatprep.subr.mxu0 0.0
        %1597 = vmatpush2.msra.mxu0 0.0
        %1598 = vmatprep.subr.mxu0 0.0
        %1599 = vmatpush2.msra.mxu0 0.0
        %1600 = vmatprep.subr.mxu0 0.0
        %1601 = vmatpush2.msra.mxu0 0.0
        %1602 = vmatprep.subr.mxu0 0.0
        %1603 = vmatpush2.msra.mxu0 0.0
        %1604 = vmatprep.subr.mxu0 0.0
        %1605 = vmatpush2.msra.mxu0 0.0
        %1606 = vmatprep.subr.mxu0 0.0
        %1607 = vmatpush2.msra.mxu0 0.0
        %1608 = vmatprep.subr.mxu0 0.0
        %1609 = vmatpush2.msra.mxu0 0.0
        %1610 = vmatprep.subr.mxu0 0.0
        %1611 = vmatpush2.msra.mxu0 0.0
        %1612 = vmatprep.subr.mxu0 0.0
        %1613 = vmatpush2.msra.mxu0 0.0
        %1614 = vmatprep.subr.mxu0 0.0
        %1615 = vmatpush2.msra.mxu0 0.0
        %1616 = vmatprep.subr.mxu0 0.0
        %1617 = vmatpush2.msra.mxu0 0.0
        %1618 = vmatprep.subr.mxu0 0.0
        %1619 = vmatpush2.msra.mxu0 0.0
        %1620 = vmatprep.subr.mxu0 0.0
        %1621 = vmatpush2.msra.mxu0 0.0
        %1622 = vmatprep.subr.mxu0 0.0
        %1623 = vmatpush2.msra.mxu0 0.0
        %1624 = vmatprep.subr.mxu0 0.0
        %1625 = vmatpush2.msra.mxu0 0.0
        %1626 = vmatprep.subr.mxu0 0.0
        %1627 = vmatpush2.msra.mxu0 0.0
        %1628 = vmatprep.mubr.f32.mxu0 0.0
        %1629 = vmatmul.mubr.f32.gmra.mxu0 %v1485
        %v1630 = vpop.f32.mrf.mxu0
        %v1631 = vadd.f32 0.0, %v1630
        %v1632 = vpop.f32.mrf.mxu0
        %1633 = vdwg.mxu0
        %v1634 = vadd.f32 %v1470, %v1560
        %v1635 = vadd.f32 %v1471, %v1562
        %v1636 = vadd.f32 %v1472, %v1631
        %v1637 = vld [vmem:[%s2] sm:$0xff]
        %1639 = vset.pattern.permute.xlu0 0
        %1640 = vperm.xlu0 %1639, %v1637
        %v1641 = vpop.permute.xlu0 %1640
        %v1643 = vadd.f32 %v1634, %v1641
        %v1644 = vadd.f32 %v1635, %v1641
        %v1645 = vadd.f32 %v1636, %v1641
        %v1646 = vmax.f32 %v1643, 0.0
        %v1647 = vmax.f32 %v1644, 0.0
        %v1648 = vmax.f32 %v1645, 0.0
        %v1649 = vpack.c.bf16 %v1646, %v1646
        %v1650 = vpack.c.bf16 %v1647, %v1647
        %v1651 = vpack.c.bf16 %v1648, %v1648
        %v1655 = vunpack.c.l.b16 %v1649
        %v1656 = vunpack.c.l.b16 %v1650
        %v1657 = vunpack.c.l.b16 %v1651
        %v1658 = vpack.c.b16 %v1656, %v1655
        %v1659 = vpack.c.b16 %v1657, %v1657
        %1662 = vst [vmem:[%s163] sm:$0xff] %v1658
        %vm1663 = vcmask 257024
        %1664 = vst.msk [vmem:[%s163 + $0x8] sm:$0xf] %vm1663, %v1659
        %s1665 = sand.u32 %s93, 1
        %s1666 = scalar_lea.sflag [#allocation3], %s1665
        %s1667 = sand.u32 %s93, 1
        %s1668 = smul.addr %s1667, 12
        %s1669 = scalar_lea.vmem [#allocation2], %s1668
        // Predicated region
        $region33: #{tpu_custom_call.1} parent=31 // pred_check
          %p1670 = pneg %p103
        $region34: #{tpu_custom_call.1} parent=31 // pred_check_branch
          %1672 = sbr.rel (%p1670) target = $region36
        $region35: #{tpu_custom_call.1} parent=31 // pred_region
          %s1674 = ssub.s32 192, 192
          %1675 = vsyncadd %s1666, %s1674
          %s1676 = smul.addr %s17, 3
          %s1677 = smul.addr %s1676, 64
          %s1678 = scalar_lea.hbm %s3, %s1677
          %s1680 = sshll.u32 %s1669, 4
          %s1681 = int_to_ptr.vmem [resolvable:$true] %s1680
          %1683 = dma.vmem_to_hbm [thread:$0]  %s1681, 192, %s1678, %s1666
        $region36: #{tpu_custom_call.1} parent=31 // pred_fallthru
          _
      $region32: #{tpu_custom_call.1} parent=5 // pred_fallthru
        _
      %p1684 = scmp.le.s32.totalorder 2, %s12
      // Predicated region
      $region37: #{tpu_custom_call.1} parent=5 // pred_check
        %p1685 = pneg %p1684
      $region38: #{tpu_custom_call.1} parent=5 // pred_check_branch
        %1687 = sbr.rel (%p1685) target = $region40
      $region39: #{tpu_custom_call.1} parent=5 // pred_region
        %s1688 = ssub.s32 %s12, 2
        // Predicated region
        $region41: #{tpu_custom_call.1} parent=39 // pred_check
          %p1689 = pneg %p109
        $region42: #{tpu_custom_call.1} parent=39 // pred_check_branch
          %1691 = sbr.rel (%p1689) target = $region44
        $region43: #{tpu_custom_call.1} parent=39 // pred_region
          %s1692 = sand.u32 %s94, 1
          %s1693 = scalar_lea.sflag [#allocation3], %s1692
          %s1694 = sand.u32 %s94, 1
          %s1695 = smul.addr %s1694, 12
          %s1696 = scalar_lea.vmem [#allocation2], %s1695
          %1697 = dma.done %s1693, 192
        $region44: #{tpu_custom_call.1} parent=39 // pred_fallthru
          _
      $region40: #{tpu_custom_call.1} parent=5 // pred_fallthru
        _
    $region6: #{tpu_custom_call.1} parent=1 // loop_footer
      %s16 = sadd.s32 1, %s12
    $region7: #{tpu_custom_call.1} parent=1 // loop_footer_branch
      %11 = sbr.rel target = $region3
    $region8: #{tpu_custom_call.1} parent=1 // loop_exit
      _
    %1698 = vsyncpa [#allocation3], 1
    %s1699 = scalar_lea.sflag [#allocation3], 1
    %1700 = vsyncpa %s1699, 1

</llo_original>
